<compile_context>
chip_gen: v7x
topology: tpu7x:2x2x1
jax: 0.10.0
libtpu: 0.0.40
codegen_flags: <defaults>
</compile_context>

<pallas_src>
import functools

import jax
import jax.numpy as jnp
from jax import lax
from jax.experimental import pallas as pl
from jax.experimental.pallas import tpu as pltpu


# ----------------------------------------------------------------------------
# Pallas kernel: fused bidirectional LSTM recurrence for one layer.
#
# grid = (2, num_chunks):
#   axis 0 = direction (0 fwd, 1 bwd)  -> "parallel"  (megacore on v7x)
#   axis 1 = time chunk                -> "arbitrary" (sequential recurrence)
#
# Inputs per grid step:
#   gx_ref  : (1, TC, B, 4H)  precomputed x @ W_ih for this direction/chunk
#   whh_ref : (1, H, 4H)      bf16 recurrent weight for this direction
# Output:
#   y_ref   : (1, TC, B, H)   hidden states, already aligned to natural time
# Scratch (persist across chunks within a direction):
#   h_ref, c_ref : (B, H) f32
# ----------------------------------------------------------------------------
def _bilstm_kernel(gx_ref, whh_ref, y_ref, h_ref, c_ref, *, tc, hidden):
    d = pl.program_id(0)      # direction
    c = pl.program_id(1)      # chunk index (in processing order)

    @pl.when(c == 0)
    def _():
        h_ref[...] = jnp.zeros_like(h_ref)
        c_ref[...] = jnp.zeros_like(c_ref)

    whh = whh_ref[0]          # (H, 4H) bf16 — only recurrent matmul in-kernel

    def step(s, carry):
        h_prev, c_prev = carry
        # fwd: row s (time increasing); bwd: row tc-1-s (time decreasing).
        row = s + d * (tc - 1 - 2 * s)

        gx = gx_ref[0, pl.ds(row, 1), :, :][0]          # (B, 4H) f32
        gates = gx + jnp.dot(h_prev.astype(jnp.bfloat16), whh,
                             preferred_element_type=jnp.float32)

        # NOTE: H may be < 128, so these gate slices are sub-lane; acceptable
        # since H is fixed by the module spec.
        i_g = jax.nn.sigmoid(gates[:, 0 * hidden:1 * hidden])
        f_g = jax.nn.sigmoid(gates[:, 1 * hidden:2 * hidden])
        g_g = jnp.tanh(gates[:, 2 * hidden:3 * hidden])
        o_g = jax.nn.sigmoid(gates[:, 3 * hidden:4 * hidden])

        c_new = f_g * c_prev + i_g * g_g
        h_new = o_g * jnp.tanh(c_new)

        # Write at `row`, so the output is already in natural time order for
        # both directions (no wrapper-side reversal needed).
        y_ref[0, pl.ds(row, 1), :, :] = h_new[None].astype(y_ref.dtype)
        return h_new, c_new

    h0 = h_ref[...]
    c0 = c_ref[...]
    h_last, c_last = lax.fori_loop(0, tc, step, (h0, c0), unroll=True)
    h_ref[...] = h_last
    c_ref[...] = c_last


def _pick_time_chunk(T, target=32):
    tc = min(T, target)
    while T % tc != 0:
        tc -= 1
    return tc


def bilstm_layer(gx_both, whh_both_bf16, *, time_chunk=32):
    """Fused bidirectional LSTM recurrence for one layer.

    gx_both       : (2, T, B, 4H) f32  precomputed input projections
                    (dir 0 = forward, dir 1 = backward), natural time order.
    whh_both_bf16 : (2, H, 4H) bf16    recurrent weights.
    returns       : (2, T, B, H) f32   hidden states aligned to natural time.
    """
    _, T, B, G = gx_both.shape
    H = G // 4
    tc = _pick_time_chunk(T, time_chunk)
    nc = T // tc

    # Backward direction reads/writes chunk (nc - 1 - c) at processing step c;
    # the in-kernel loop walks that chunk back-to-front.
    def rev_chunk_map(d, c):
        return (d, c + d * (nc - 1 - 2 * c), 0, 0)

    grid_spec = pltpu.PrefetchScalarGridSpec(
        num_scalar_prefetch=0,
        grid=(2, nc),
        in_specs=[
            pl.BlockSpec((1, tc, B, 4 * H), rev_chunk_map),
            pl.BlockSpec((1, H, 4 * H), lambda d, c: (d, 0, 0)),
        ],
        out_specs=pl.BlockSpec((1, tc, B, H), rev_chunk_map),
        scratch_shapes=[
            pltpu.VMEM((B, H), jnp.float32),  # h
            pltpu.VMEM((B, H), jnp.float32),  # c
        ],
    )

    kernel = functools.partial(_bilstm_kernel, tc=tc, hidden=H)
    return pl.pallas_call(
        kernel,
        out_shape=jax.ShapeDtypeStruct((2, T, B, H), jnp.float32),
        grid_spec=grid_spec,
        compiler_params=pltpu.CompilerParams(
            dimension_semantics=("parallel", "arbitrary")),
    )(gx_both, whh_both_bf16)


# ----------------------------------------------------------------------------
# RecurrentEncoder wrapper (embedding + hoisted input projections in XLA).
# ----------------------------------------------------------------------------
def init_params(key, vocab_sizes, embed_dims, hidden_size, num_layers):
    """PyTorch-style uniform(-1/sqrt(H), 1/sqrt(H)) init; weights stored
    transposed: w_ih (2, D_in, 4H), w_hh (2, H, 4H); gate order (i,f,g,o)."""
    params = {"embeddings": [], "lstm": []}
    k_emb, k_rnn = jax.random.split(key)

    emb_keys = jax.random.split(k_emb, len(vocab_sizes))
    for kk, v, d in zip(emb_keys, vocab_sizes, embed_dims):
        params["embeddings"].append(
            jax.random.normal(kk, (v, d), dtype=jnp.float32) * 0.1)

    scale = 1.0 / float(hidden_size) ** 0.5
    input_size = sum(embed_dims)
    layer_keys = jax.random.split(k_rnn, num_layers)
    for layer in range(num_layers):
        d_in = input_size if layer == 0 else 2 * hidden_size
        k_ih, k_hh = jax.random.split(layer_keys[layer])
        w_ih = jax.random.uniform(k_ih, (2, d_in, 4 * hidden_size),
                                  minval=-scale, maxval=scale,
                                  dtype=jnp.float32)
        w_hh = jax.random.uniform(k_hh, (2, hidden_size, 4 * hidden_size),
                                  minval=-scale, maxval=scale,
                                  dtype=jnp.float32)
        params["lstm"].append({"w_ih": w_ih, "w_hh": w_hh})
    return params


@functools.partial(jax.jit, static_argnames=("training",))
def recurrent_encoder_forward(params, word_ids, feat_ids, training=False):
    """Mirrors RecurrentEncoder.forward(training, word_ids, feat_ids).

    word_ids, feat_ids : (B, T) int32 token indices (batch_first)
    returns            : (B, T, 2*hidden_size) float32
    """
    # TODO(synk): training-mode dynamic word dropout (random UNK replacement)
    # and nn.LSTM inter-layer dropout are training-only; eval path is identity.
    del training

    emb_w = jnp.take(params["embeddings"][0], word_ids, axis=0)  # (B, T, d0)
    emb_f = jnp.take(params["embeddings"][1], feat_ids, axis=0)  # (B, T, d1)
    x = jnp.concatenate([emb_w, emb_f], axis=-1)                 # (B, T, D)
    B, T, _ = x.shape
    H = params["lstm"][0]["w_hh"].shape[1]

    y = None  # (2, T, B, H): dir 0 = forward, dir 1 = backward
    for li, layer_p in enumerate(params["lstm"]):
        w_ih = layer_p["w_ih"]                         # (2, D_in, 4H)
        w_hh = layer_p["w_hh"].astype(jnp.bfloat16)    # (2, H, 4H) bf16 MXU in

        if li == 0:
            # Hoisted input projection: one big matmul for all T and both dirs.
            gx = jnp.einsum("btd,zdg->ztbg", x, w_ih,
                            preferred_element_type=jnp.float32)
        else:
            # Previous layer output is kept split by direction; contract over
            # (direction, H) directly -> no per-layer concat HBM pass.
            w_split = w_ih.reshape(2, 2, H, 4 * H)     # (z, half, H, 4H)
            gx = jnp.einsum("utbh,zuhg->ztbg", y, w_split,
                            preferred_element_type=jnp.float32)

        y = bilstm_layer(gx, w_hh)                     # (2, T, B, H)

    # (2, T, B, H) -> (B, T, 2H), forward half first (PyTorch convention).
    return jnp.transpose(y, (2, 1, 0, 3)).reshape(B, T, 2 * H)


# ----------------------------------------------------------------------------
# Pure-JAX reference (f32) for a sanity check of the fused kernel.
# ----------------------------------------------------------------------------
def _reference_forward(params, word_ids, feat_ids):
    emb_w = jnp.take(params["embeddings"][0], word_ids, axis=0)
    emb_f = jnp.take(params["embeddings"][1], feat_ids, axis=0)
    x = jnp.concatenate([emb_w, emb_f], axis=-1)
    B, T, _ = x.shape
    H = params["lstm"][0]["w_hh"].shape[1]

    def run_dir(seq, w_ih, w_hh, reverse):
        def cell(carry, xt):
            h, c = carry
            g = xt @ w_ih + h @ w_hh
            i = jax.nn.sigmoid(g[:, :H]); f = jax.nn.sigmoid(g[:, H:2 * H])
            gg = jnp.tanh(g[:, 2 * H:3 * H]); o = jax.nn.sigmoid(g[:, 3 * H:])
            c = f * c + i * gg
            h = o * jnp.tanh(c)
            return (h, c), h
        init = (jnp.zeros((B, H), jnp.float32), jnp.zeros((B, H), jnp.float32))
        _, ys = lax.scan(cell, init, seq, reverse=reverse)
        return ys  # (T, B, H), aligned to natural time

    h_seq = jnp.transpose(x, (1, 0, 2))  # (T, B, D)
    for lp in params["lstm"]:
        yf = run_dir(h_seq, lp["w_ih"][0], lp["w_hh"][0], False)
        yb = run_dir(h_seq, lp["w_ih"][1], lp["w_hh"][1], True)
        h_seq = jnp.concatenate([yf, yb], axis=-1)
    return jnp.transpose(h_seq, (1, 0, 2))


if __name__ == "__main__":
    B, T = 2, 8
    hidden_size = 32
    num_layers = 3
    vocab_sizes = (20, 10)   # word vocab, feature vocab
    embed_dims = (8, 8)      # sum -> LSTM input_size = 16

    key = jax.random.PRNGKey(0)
    k_params, k_words, k_feats = jax.random.split(key, 3)

    params = init_params(k_params, vocab_sizes, embed_dims,
                         hidden_size, num_layers)

    word_ids = jax.random.randint(k_words, (B, T), 1, vocab_sizes[0],
                                  dtype=jnp.int32)
    feat_ids = jax.random.randint(k_feats, (B, T), 1, vocab_sizes[1],
                                  dtype=jnp.int32)

    out = recurrent_encoder_forward(params, word_ids, feat_ids, training=False)
    out = jax.block_until_ready(out)

    assert out.shape == (B, T, 2 * hidden_size), out.shape
    assert bool(jnp.all(jnp.isfinite(out)))

    # Sanity check against a pure-JAX f32 LSTM (kernel uses bf16 MXU inputs,
    # so allow a generous tolerance).
    ref = _reference_forward(params, word_ids, feat_ids)
    max_diff = float(jnp.max(jnp.abs(out - ref)))
    assert max_diff < 5e-2, max_diff

    print("KERNEL_OK")
</pallas_src>

<mosaic_0001>
module attributes {stable_mosaic.version = 11 : i64} {
  func.func @_bilstm_kernel(%arg0: i32, %arg1: i32, %arg2: memref<1x8x2x128xf32, #tpu.memory_space<vmem>>, %arg3: memref<1x32x128xbf16, #tpu.memory_space<vmem>>, %arg4: memref<1x8x2x32xf32, #tpu.memory_space<vmem>>, %arg5: memref<2x32xf32, #tpu.memory_space<vmem>>, %arg6: memref<2x32xf32, #tpu.memory_space<vmem>>) attributes {dimension_semantics = [#tpu.dimension_semantics<parallel>, #tpu.dimension_semantics<arbitrary>], iteration_bounds = array<i64: 2, 1>, scalar_prefetch = 0 : i64, scratch_operands = 2 : i64, tpu.core_type = #tpu.core_type<tc>, window_params = [{transform_indices = @transform_0, window_bounds = array<i64: 1, 8, 2, 128>}, {transform_indices = @transform_1, window_bounds = array<i64: 1, 32, 128>}, {transform_indices = @transform_2, window_bounds = array<i64: 1, 8, 2, 32>}]} {
    %c0_i32 = arith.constant 0 : i32
    %0 = arith.cmpi eq, %arg1, %c0_i32 : i32
    %1 = arith.extui %0 : i1 to i32
    %c0_i32_0 = arith.constant 0 : i32
    %2 = arith.cmpi ne, %1, %c0_i32_0 : i32
    scf.if %2 {
      %cst_107 = arith.constant 0.000000e+00 : f32
      %337 = vector.broadcast %cst_107 : f32 to vector<2x32xf32>
      %c0_108 = arith.constant 0 : index
      %c0_109 = arith.constant 0 : index
      %338 = vector.load %arg5[%c0_108, %c0_109] : memref<2x32xf32, #tpu.memory_space<vmem>>, vector<2x32xf32>
      tpu.vector_store %arg5[%c0_108, %c0_109], %337 {strides = array<i32>} : memref<2x32xf32, #tpu.memory_space<vmem>>, vector<2x32xf32>,
      %cst_110 = arith.constant 0.000000e+00 : f32
      %339 = vector.broadcast %cst_110 : f32 to vector<2x32xf32>
      %c0_111 = arith.constant 0 : index
      %c0_112 = arith.constant 0 : index
      %340 = vector.load %arg6[%c0_111, %c0_112] : memref<2x32xf32, #tpu.memory_space<vmem>>, vector<2x32xf32>
      tpu.vector_store %arg6[%c0_111, %c0_112], %339 {strides = array<i32>} : memref<2x32xf32, #tpu.memory_space<vmem>>, vector<2x32xf32>,
    } else {
    }
    %c0 = arith.constant 0 : index
    %c0_1 = arith.constant 0 : index
    %c0_2 = arith.constant 0 : index
    %3 = vector.load %arg3[%c0, %c0_1, %c0_2] : memref<1x32x128xbf16, #tpu.memory_space<vmem>>, vector<1x32x128xbf16>
    %4 = vector.shape_cast %3 : vector<1x32x128xbf16> to vector<32x128xbf16>
    %c0_3 = arith.constant 0 : index
    %c0_4 = arith.constant 0 : index
    %5 = vector.load %arg5[%c0_3, %c0_4] : memref<2x32xf32, #tpu.memory_space<vmem>>, vector<2x32xf32>
    %c0_5 = arith.constant 0 : index
    %c0_6 = arith.constant 0 : index
    %6 = vector.load %arg6[%c0_5, %c0_6] : memref<2x32xf32, #tpu.memory_space<vmem>>, vector<2x32xf32>
    %c0_i32_7 = arith.constant 0 : i32
    %c2_i32 = arith.constant 2 : i32
    %7 = arith.muli %c2_i32, %c0_i32_7 : i32
    %c7_i32 = arith.constant 7 : i32
    %8 = arith.subi %c7_i32, %7 : i32
    %9 = arith.muli %arg0, %8 : i32
    %10 = arith.addi %c0_i32_7, %9 : i32
    %c0_8 = arith.constant 0 : index
    %11 = arith.index_cast %10 : i32 to index
    %c0_9 = arith.constant 0 : index
    %c0_10 = arith.constant 0 : index
    %12 = vector.load %arg2[%c0_8, %11, %c0_9, %c0_10] : memref<1x8x2x128xf32, #tpu.memory_space<vmem>>, vector<1x1x2x128xf32>
    %13 = vector.shape_cast %12 : vector<1x1x2x128xf32> to vector<1x2x128xf32>
    %14 = vector.shape_cast %13 : vector<1x2x128xf32> to vector<2x128xf32>
    %15 = arith.truncf %5 : vector<2x32xf32> to vector<2x32xbf16>
    %cst = arith.constant dense<0.000000e+00> : vector<2x128xf32>
    %16 = tpu.matmul %15, %4, %cst {dimension_numbers = #tpu.dot_dimension_numbers<[1], [0], [0], [1], [0, 0, 1, 1], [], []>} : vector<2x32xbf16>, vector<32x128xbf16>, vector<2x128xf32> -> vector<2x128xf32>
    %17 = arith.addf %14, %16 : vector<2x128xf32>
    %18 = vector.extract_strided_slice %17 {offsets = [0, 0], sizes = [2, 32], strides = [1, 1]} : vector<2x128xf32> to vector<2x32xf32>
    %19 = arith.negf %18 : vector<2x32xf32>
    %20 = math.exp %19 : vector<2x32xf32>
    %cst_11 = arith.constant 1.000000e+00 : f32
    %21 = vector.broadcast %cst_11 : f32 to vector<2x32xf32>
    %22 = arith.addf %21, %20 : vector<2x32xf32>
    %23 = arith.divf %21, %22 : vector<2x32xf32>
    %24 = vector.extract_strided_slice %17 {offsets = [0, 32], sizes = [2, 32], strides = [1, 1]} : vector<2x128xf32> to vector<2x32xf32>
    %25 = arith.negf %24 : vector<2x32xf32>
    %26 = math.exp %25 : vector<2x32xf32>
    %cst_12 = arith.constant 1.000000e+00 : f32
    %27 = vector.broadcast %cst_12 : f32 to vector<2x32xf32>
    %28 = arith.addf %27, %26 : vector<2x32xf32>
    %29 = arith.divf %27, %28 : vector<2x32xf32>
    %30 = vector.extract_strided_slice %17 {offsets = [0, 64], sizes = [2, 32], strides = [1, 1]} : vector<2x128xf32> to vector<2x32xf32>
    %31 = math.tanh %30 : vector<2x32xf32>
    %32 = vector.extract_strided_slice %17 {offsets = [0, 96], sizes = [2, 32], strides = [1, 1]} : vector<2x128xf32> to vector<2x32xf32>
    %33 = arith.negf %32 : vector<2x32xf32>
    %34 = math.exp %33 : vector<2x32xf32>
    %cst_13 = arith.constant 1.000000e+00 : f32
    %35 = vector.broadcast %cst_13 : f32 to vector<2x32xf32>
    %36 = arith.addf %35, %34 : vector<2x32xf32>
    %37 = arith.divf %35, %36 : vector<2x32xf32>
    %38 = arith.mulf %29, %6 : vector<2x32xf32>
    %39 = arith.mulf %23, %31 : vector<2x32xf32>
    %40 = arith.addf %38, %39 : vector<2x32xf32>
    %41 = math.tanh %40 : vector<2x32xf32>
    %42 = arith.mulf %37, %41 : vector<2x32xf32>
    %43 = vector.shape_cast %42 : vector<2x32xf32> to vector<1x2x32xf32>
    %c0_14 = arith.constant 0 : index
    %44 = arith.index_cast %10 : i32 to index
    %c0_15 = arith.constant 0 : index
    %c0_16 = arith.constant 0 : index
    %45 = vector.load %arg4[%c0_14, %44, %c0_15, %c0_16] : memref<1x8x2x32xf32, #tpu.memory_space<vmem>>, vector<1x1x2x32xf32>
    %46 = vector.shape_cast %45 : vector<1x1x2x32xf32> to vector<1x2x32xf32>
    %47 = vector.shape_cast %43 : vector<1x2x32xf32> to vector<1x1x2x32xf32>
    tpu.vector_store %arg4[%c0_14, %44, %c0_15, %c0_16], %47 {strides = array<i32>} : memref<1x8x2x32xf32, #tpu.memory_space<vmem>>, vector<1x1x2x32xf32>,
    %c1_i32 = arith.constant 1 : i32
    %c2_i32_17 = arith.constant 2 : i32
    %48 = arith.muli %c2_i32_17, %c1_i32 : i32
    %c7_i32_18 = arith.constant 7 : i32
    %49 = arith.subi %c7_i32_18, %48 : i32
    %50 = arith.muli %arg0, %49 : i32
    %51 = arith.addi %c1_i32, %50 : i32
    %c0_19 = arith.constant 0 : index
    %52 = arith.index_cast %51 : i32 to index
    %c0_20 = arith.constant 0 : index
    %c0_21 = arith.constant 0 : index
    %53 = vector.load %arg2[%c0_19, %52, %c0_20, %c0_21] : memref<1x8x2x128xf32, #tpu.memory_space<vmem>>, vector<1x1x2x128xf32>
    %54 = vector.shape_cast %53 : vector<1x1x2x128xf32> to vector<1x2x128xf32>
    %55 = vector.shape_cast %54 : vector<1x2x128xf32> to vector<2x128xf32>
    %56 = arith.truncf %42 : vector<2x32xf32> to vector<2x32xbf16>
    %cst_22 = arith.constant dense<0.000000e+00> : vector<2x128xf32>
    %57 = tpu.matmul %56, %4, %cst_22 {dimension_numbers = #tpu.dot_dimension_numbers<[1], [0], [0], [1], [0, 0, 1, 1], [], []>} : vector<2x32xbf16>, vector<32x128xbf16>, vector<2x128xf32> -> vector<2x128xf32>
    %58 = arith.addf %55, %57 : vector<2x128xf32>
    %59 = vector.extract_strided_slice %58 {offsets = [0, 0], sizes = [2, 32], strides = [1, 1]} : vector<2x128xf32> to vector<2x32xf32>
    %60 = arith.negf %59 : vector<2x32xf32>
    %61 = math.exp %60 : vector<2x32xf32>
    %cst_23 = arith.constant 1.000000e+00 : f32
    %62 = vector.broadcast %cst_23 : f32 to vector<2x32xf32>
    %63 = arith.addf %62, %61 : vector<2x32xf32>
    %64 = arith.divf %62, %63 : vector<2x32xf32>
    %65 = vector.extract_strided_slice %58 {offsets = [0, 32], sizes = [2, 32], strides = [1, 1]} : vector<2x128xf32> to vector<2x32xf32>
    %66 = arith.negf %65 : vector<2x32xf32>
    %67 = math.exp %66 : vector<2x32xf32>
    %cst_24 = arith.constant 1.000000e+00 : f32
    %68 = vector.broadcast %cst_24 : f32 to vector<2x32xf32>
    %69 = arith.addf %68, %67 : vector<2x32xf32>
    %70 = arith.divf %68, %69 : vector<2x32xf32>
    %71 = vector.extract_strided_slice %58 {offsets = [0, 64], sizes = [2, 32], strides = [1, 1]} : vector<2x128xf32> to vector<2x32xf32>
    %72 = math.tanh %71 : vector<2x32xf32>
    %73 = vector.extract_strided_slice %58 {offsets = [0, 96], sizes = [2, 32], strides = [1, 1]} : vector<2x128xf32> to vector<2x32xf32>
    %74 = arith.negf %73 : vector<2x32xf32>
    %75 = math.exp %74 : vector<2x32xf32>
    %cst_25 = arith.constant 1.000000e+00 : f32
    %76 = vector.broadcast %cst_25 : f32 to vector<2x32xf32>
    %77 = arith.addf %76, %75 : vector<2x32xf32>
    %78 = arith.divf %76, %77 : vector<2x32xf32>
    %79 = arith.mulf %70, %40 : vector<2x32xf32>
    %80 = arith.mulf %64, %72 : vector<2x32xf32>
    %81 = arith.addf %79, %80 : vector<2x32xf32>
    %82 = math.tanh %81 : vector<2x32xf32>
    %83 = arith.mulf %78, %82 : vector<2x32xf32>
    %84 = vector.shape_cast %83 : vector<2x32xf32> to vector<1x2x32xf32>
    %c0_26 = arith.constant 0 : index
    %85 = arith.index_cast %51 : i32 to index
    %c0_27 = arith.constant 0 : index
    %c0_28 = arith.constant 0 : index
    %86 = vector.load %arg4[%c0_26, %85, %c0_27, %c0_28] : memref<1x8x2x32xf32, #tpu.memory_space<vmem>>, vector<1x1x2x32xf32>
    %87 = vector.shape_cast %86 : vector<1x1x2x32xf32> to vector<1x2x32xf32>
    %88 = vector.shape_cast %84 : vector<1x2x32xf32> to vector<1x1x2x32xf32>
    tpu.vector_store %arg4[%c0_26, %85, %c0_27, %c0_28], %88 {strides = array<i32>} : memref<1x8x2x32xf32, #tpu.memory_space<vmem>>, vector<1x1x2x32xf32>,
    %c2_i32_29 = arith.constant 2 : i32
    %c2_i32_30 = arith.constant 2 : i32
    %89 = arith.muli %c2_i32_30, %c2_i32_29 : i32
    %c7_i32_31 = arith.constant 7 : i32
    %90 = arith.subi %c7_i32_31, %89 : i32
    %91 = arith.muli %arg0, %90 : i32
    %92 = arith.addi %c2_i32_29, %91 : i32
    %c0_32 = arith.constant 0 : index
    %93 = arith.index_cast %92 : i32 to index
    %c0_33 = arith.constant 0 : index
    %c0_34 = arith.constant 0 : index
    %94 = vector.load %arg2[%c0_32, %93, %c0_33, %c0_34] : memref<1x8x2x128xf32, #tpu.memory_space<vmem>>, vector<1x1x2x128xf32>
    %95 = vector.shape_cast %94 : vector<1x1x2x128xf32> to vector<1x2x128xf32>
    %96 = vector.shape_cast %95 : vector<1x2x128xf32> to vector<2x128xf32>
    %97 = arith.truncf %83 : vector<2x32xf32> to vector<2x32xbf16>
    %cst_35 = arith.constant dense<0.000000e+00> : vector<2x128xf32>
    %98 = tpu.matmul %97, %4, %cst_35 {dimension_numbers = #tpu.dot_dimension_numbers<[1], [0], [0], [1], [0, 0, 1, 1], [], []>} : vector<2x32xbf16>, vector<32x128xbf16>, vector<2x128xf32> -> vector<2x128xf32>
    %99 = arith.addf %96, %98 : vector<2x128xf32>
    %100 = vector.extract_strided_slice %99 {offsets = [0, 0], sizes = [2, 32], strides = [1, 1]} : vector<2x128xf32> to vector<2x32xf32>
    %101 = arith.negf %100 : vector<2x32xf32>
    %102 = math.exp %101 : vector<2x32xf32>
    %cst_36 = arith.constant 1.000000e+00 : f32
    %103 = vector.broadcast %cst_36 : f32 to vector<2x32xf32>
    %104 = arith.addf %103, %102 : vector<2x32xf32>
    %105 = arith.divf %103, %104 : vector<2x32xf32>
    %106 = vector.extract_strided_slice %99 {offsets = [0, 32], sizes = [2, 32], strides = [1, 1]} : vector<2x128xf32> to vector<2x32xf32>
    %107 = arith.negf %106 : vector<2x32xf32>
    %108 = math.exp %107 : vector<2x32xf32>
    %cst_37 = arith.constant 1.000000e+00 : f32
    %109 = vector.broadcast %cst_37 : f32 to vector<2x32xf32>
    %110 = arith.addf %109, %108 : vector<2x32xf32>
    %111 = arith.divf %109, %110 : vector<2x32xf32>
    %112 = vector.extract_strided_slice %99 {offsets = [0, 64], sizes = [2, 32], strides = [1, 1]} : vector<2x128xf32> to vector<2x32xf32>
    %113 = math.tanh %112 : vector<2x32xf32>
    %114 = vector.extract_strided_slice %99 {offsets = [0, 96], sizes = [2, 32], strides = [1, 1]} : vector<2x128xf32> to vector<2x32xf32>
    %115 = arith.negf %114 : vector<2x32xf32>
    %116 = math.exp %115 : vector<2x32xf32>
    %cst_38 = arith.constant 1.000000e+00 : f32
    %117 = vector.broadcast %cst_38 : f32 to vector<2x32xf32>
    %118 = arith.addf %117, %116 : vector<2x32xf32>
    %119 = arith.divf %117, %118 : vector<2x32xf32>
    %120 = arith.mulf %111, %81 : vector<2x32xf32>
    %121 = arith.mulf %105, %113 : vector<2x32xf32>
    %122 = arith.addf %120, %121 : vector<2x32xf32>
    %123 = math.tanh %122 : vector<2x32xf32>
    %124 = arith.mulf %119, %123 : vector<2x32xf32>
    %125 = vector.shape_cast %124 : vector<2x32xf32> to vector<1x2x32xf32>
    %c0_39 = arith.constant 0 : index
    %126 = arith.index_cast %92 : i32 to index
    %c0_40 = arith.constant 0 : index
    %c0_41 = arith.constant 0 : index
    %127 = vector.load %arg4[%c0_39, %126, %c0_40, %c0_41] : memref<1x8x2x32xf32, #tpu.memory_space<vmem>>, vector<1x1x2x32xf32>
    %128 = vector.shape_cast %127 : vector<1x1x2x32xf32> to vector<1x2x32xf32>
    %129 = vector.shape_cast %125 : vector<1x2x32xf32> to vector<1x1x2x32xf32>
    tpu.vector_store %arg4[%c0_39, %126, %c0_40, %c0_41], %129 {strides = array<i32>} : memref<1x8x2x32xf32, #tpu.memory_space<vmem>>, vector<1x1x2x32xf32>,
    %c3_i32 = arith.constant 3 : i32
    %c2_i32_42 = arith.constant 2 : i32
    %130 = arith.muli %c2_i32_42, %c3_i32 : i32
    %c7_i32_43 = arith.constant 7 : i32
    %131 = arith.subi %c7_i32_43, %130 : i32
    %132 = arith.muli %arg0, %131 : i32
    %133 = arith.addi %c3_i32, %132 : i32
    %c0_44 = arith.constant 0 : index
    %134 = arith.index_cast %133 : i32 to index
    %c0_45 = arith.constant 0 : index
    %c0_46 = arith.constant 0 : index
    %135 = vector.load %arg2[%c0_44, %134, %c0_45, %c0_46] : memref<1x8x2x128xf32, #tpu.memory_space<vmem>>, vector<1x1x2x128xf32>
    %136 = vector.shape_cast %135 : vector<1x1x2x128xf32> to vector<1x2x128xf32>
    %137 = vector.shape_cast %136 : vector<1x2x128xf32> to vector<2x128xf32>
    %138 = arith.truncf %124 : vector<2x32xf32> to vector<2x32xbf16>
    %cst_47 = arith.constant dense<0.000000e+00> : vector<2x128xf32>
    %139 = tpu.matmul %138, %4, %cst_47 {dimension_numbers = #tpu.dot_dimension_numbers<[1], [0], [0], [1], [0, 0, 1, 1], [], []>} : vector<2x32xbf16>, vector<32x128xbf16>, vector<2x128xf32> -> vector<2x128xf32>
    %140 = arith.addf %137, %139 : vector<2x128xf32>
    %141 = vector.extract_strided_slice %140 {offsets = [0, 0], sizes = [2, 32], strides = [1, 1]} : vector<2x128xf32> to vector<2x32xf32>
    %142 = arith.negf %141 : vector<2x32xf32>
    %143 = math.exp %142 : vector<2x32xf32>
    %cst_48 = arith.constant 1.000000e+00 : f32
    %144 = vector.broadcast %cst_48 : f32 to vector<2x32xf32>
    %145 = arith.addf %144, %143 : vector<2x32xf32>
    %146 = arith.divf %144, %145 : vector<2x32xf32>
    %147 = vector.extract_strided_slice %140 {offsets = [0, 32], sizes = [2, 32], strides = [1, 1]} : vector<2x128xf32> to vector<2x32xf32>
    %148 = arith.negf %147 : vector<2x32xf32>
    %149 = math.exp %148 : vector<2x32xf32>
    %cst_49 = arith.constant 1.000000e+00 : f32
    %150 = vector.broadcast %cst_49 : f32 to vector<2x32xf32>
    %151 = arith.addf %150, %149 : vector<2x32xf32>
    %152 = arith.divf %150, %151 : vector<2x32xf32>
    %153 = vector.extract_strided_slice %140 {offsets = [0, 64], sizes = [2, 32], strides = [1, 1]} : vector<2x128xf32> to vector<2x32xf32>
    %154 = math.tanh %153 : vector<2x32xf32>
    %155 = vector.extract_strided_slice %140 {offsets = [0, 96], sizes = [2, 32], strides = [1, 1]} : vector<2x128xf32> to vector<2x32xf32>
    %156 = arith.negf %155 : vector<2x32xf32>
    %157 = math.exp %156 : vector<2x32xf32>
    %cst_50 = arith.constant 1.000000e+00 : f32
    %158 = vector.broadcast %cst_50 : f32 to vector<2x32xf32>
    %159 = arith.addf %158, %157 : vector<2x32xf32>
    %160 = arith.divf %158, %159 : vector<2x32xf32>
    %161 = arith.mulf %152, %122 : vector<2x32xf32>
    %162 = arith.mulf %146, %154 : vector<2x32xf32>
    %163 = arith.addf %161, %162 : vector<2x32xf32>
    %164 = math.tanh %163 : vector<2x32xf32>
    %165 = arith.mulf %160, %164 : vector<2x32xf32>
    %166 = vector.shape_cast %165 : vector<2x32xf32> to vector<1x2x32xf32>
    %c0_51 = arith.constant 0 : index
    %167 = arith.index_cast %133 : i32 to index
    %c0_52 = arith.constant 0 : index
    %c0_53 = arith.constant 0 : index
    %168 = vector.load %arg4[%c0_51, %167, %c0_52, %c0_53] : memref<1x8x2x32xf32, #tpu.memory_space<vmem>>, vector<1x1x2x32xf32>
    %169 = vector.shape_cast %168 : vector<1x1x2x32xf32> to vector<1x2x32xf32>
    %170 = vector.shape_cast %166 : vector<1x2x32xf32> to vector<1x1x2x32xf32>
    tpu.vector_store %arg4[%c0_51, %167, %c0_52, %c0_53], %170 {strides = array<i32>} : memref<1x8x2x32xf32, #tpu.memory_space<vmem>>, vector<1x1x2x32xf32>,
    %c4_i32 = arith.constant 4 : i32
    %c2_i32_54 = arith.constant 2 : i32
    %171 = arith.muli %c2_i32_54, %c4_i32 : i32
    %c7_i32_55 = arith.constant 7 : i32
    %172 = arith.subi %c7_i32_55, %171 : i32
    %173 = arith.muli %arg0, %172 : i32
    %174 = arith.addi %c4_i32, %173 : i32
    %c0_56 = arith.constant 0 : index
    %175 = arith.index_cast %174 : i32 to index
    %c0_57 = arith.constant 0 : index
    %c0_58 = arith.constant 0 : index
    %176 = vector.load %arg2[%c0_56, %175, %c0_57, %c0_58] : memref<1x8x2x128xf32, #tpu.memory_space<vmem>>, vector<1x1x2x128xf32>
    %177 = vector.shape_cast %176 : vector<1x1x2x128xf32> to vector<1x2x128xf32>
    %178 = vector.shape_cast %177 : vector<1x2x128xf32> to vector<2x128xf32>
    %179 = arith.truncf %165 : vector<2x32xf32> to vector<2x32xbf16>
    %cst_59 = arith.constant dense<0.000000e+00> : vector<2x128xf32>
    %180 = tpu.matmul %179, %4, %cst_59 {dimension_numbers = #tpu.dot_dimension_numbers<[1], [0], [0], [1], [0, 0, 1, 1], [], []>} : vector<2x32xbf16>, vector<32x128xbf16>, vector<2x128xf32> -> vector<2x128xf32>
    %181 = arith.addf %178, %180 : vector<2x128xf32>
    %182 = vector.extract_strided_slice %181 {offsets = [0, 0], sizes = [2, 32], strides = [1, 1]} : vector<2x128xf32> to vector<2x32xf32>
    %183 = arith.negf %182 : vector<2x32xf32>
    %184 = math.exp %183 : vector<2x32xf32>
    %cst_60 = arith.constant 1.000000e+00 : f32
    %185 = vector.broadcast %cst_60 : f32 to vector<2x32xf32>
    %186 = arith.addf %185, %184 : vector<2x32xf32>
    %187 = arith.divf %185, %186 : vector<2x32xf32>
    %188 = vector.extract_strided_slice %181 {offsets = [0, 32], sizes = [2, 32], strides = [1, 1]} : vector<2x128xf32> to vector<2x32xf32>
    %189 = arith.negf %188 : vector<2x32xf32>
    %190 = math.exp %189 : vector<2x32xf32>
    %cst_61 = arith.constant 1.000000e+00 : f32
    %191 = vector.broadcast %cst_61 : f32 to vector<2x32xf32>
    %192 = arith.addf %191, %190 : vector<2x32xf32>
    %193 = arith.divf %191, %192 : vector<2x32xf32>
    %194 = vector.extract_strided_slice %181 {offsets = [0, 64], sizes = [2, 32], strides = [1, 1]} : vector<2x128xf32> to vector<2x32xf32>
    %195 = math.tanh %194 : vector<2x32xf32>
    %196 = vector.extract_strided_slice %181 {offsets = [0, 96], sizes = [2, 32], strides = [1, 1]} : vector<2x128xf32> to vector<2x32xf32>
    %197 = arith.negf %196 : vector<2x32xf32>
    %198 = math.exp %197 : vector<2x32xf32>
    %cst_62 = arith.constant 1.000000e+00 : f32
    %199 = vector.broadcast %cst_62 : f32 to vector<2x32xf32>
    %200 = arith.addf %199, %198 : vector<2x32xf32>
    %201 = arith.divf %199, %200 : vector<2x32xf32>
    %202 = arith.mulf %193, %163 : vector<2x32xf32>
    %203 = arith.mulf %187, %195 : vector<2x32xf32>
    %204 = arith.addf %202, %203 : vector<2x32xf32>
    %205 = math.tanh %204 : vector<2x32xf32>
    %206 = arith.mulf %201, %205 : vector<2x32xf32>
    %207 = vector.shape_cast %206 : vector<2x32xf32> to vector<1x2x32xf32>
    %c0_63 = arith.constant 0 : index
    %208 = arith.index_cast %174 : i32 to index
    %c0_64 = arith.constant 0 : index
    %c0_65 = arith.constant 0 : index
    %209 = vector.load %arg4[%c0_63, %208, %c0_64, %c0_65] : memref<1x8x2x32xf32, #tpu.memory_space<vmem>>, vector<1x1x2x32xf32>
    %210 = vector.shape_cast %209 : vector<1x1x2x32xf32> to vector<1x2x32xf32>
    %211 = vector.shape_cast %207 : vector<1x2x32xf32> to vector<1x1x2x32xf32>
    tpu.vector_store %arg4[%c0_63, %208, %c0_64, %c0_65], %211 {strides = array<i32>} : memref<1x8x2x32xf32, #tpu.memory_space<vmem>>, vector<1x1x2x32xf32>,
    %c5_i32 = arith.constant 5 : i32
    %c2_i32_66 = arith.constant 2 : i32
    %212 = arith.muli %c2_i32_66, %c5_i32 : i32
    %c7_i32_67 = arith.constant 7 : i32
    %213 = arith.subi %c7_i32_67, %212 : i32
    %214 = arith.muli %arg0, %213 : i32
    %215 = arith.addi %c5_i32, %214 : i32
    %c0_68 = arith.constant 0 : index
    %216 = arith.index_cast %215 : i32 to index
    %c0_69 = arith.constant 0 : index
    %c0_70 = arith.constant 0 : index
    %217 = vector.load %arg2[%c0_68, %216, %c0_69, %c0_70] : memref<1x8x2x128xf32, #tpu.memory_space<vmem>>, vector<1x1x2x128xf32>
    %218 = vector.shape_cast %217 : vector<1x1x2x128xf32> to vector<1x2x128xf32>
    %219 = vector.shape_cast %218 : vector<1x2x128xf32> to vector<2x128xf32>
    %220 = arith.truncf %206 : vector<2x32xf32> to vector<2x32xbf16>
    %cst_71 = arith.constant dense<0.000000e+00> : vector<2x128xf32>
    %221 = tpu.matmul %220, %4, %cst_71 {dimension_numbers = #tpu.dot_dimension_numbers<[1], [0], [0], [1], [0, 0, 1, 1], [], []>} : vector<2x32xbf16>, vector<32x128xbf16>, vector<2x128xf32> -> vector<2x128xf32>
    %222 = arith.addf %219, %221 : vector<2x128xf32>
    %223 = vector.extract_strided_slice %222 {offsets = [0, 0], sizes = [2, 32], strides = [1, 1]} : vector<2x128xf32> to vector<2x32xf32>
    %224 = arith.negf %223 : vector<2x32xf32>
    %225 = math.exp %224 : vector<2x32xf32>
    %cst_72 = arith.constant 1.000000e+00 : f32
    %226 = vector.broadcast %cst_72 : f32 to vector<2x32xf32>
    %227 = arith.addf %226, %225 : vector<2x32xf32>
    %228 = arith.divf %226, %227 : vector<2x32xf32>
    %229 = vector.extract_strided_slice %222 {offsets = [0, 32], sizes = [2, 32], strides = [1, 1]} : vector<2x128xf32> to vector<2x32xf32>
    %230 = arith.negf %229 : vector<2x32xf32>
    %231 = math.exp %230 : vector<2x32xf32>
    %cst_73 = arith.constant 1.000000e+00 : f32
    %232 = vector.broadcast %cst_73 : f32 to vector<2x32xf32>
    %233 = arith.addf %232, %231 : vector<2x32xf32>
    %234 = arith.divf %232, %233 : vector<2x32xf32>
    %235 = vector.extract_strided_slice %222 {offsets = [0, 64], sizes = [2, 32], strides = [1, 1]} : vector<2x128xf32> to vector<2x32xf32>
    %236 = math.tanh %235 : vector<2x32xf32>
    %237 = vector.extract_strided_slice %222 {offsets = [0, 96], sizes = [2, 32], strides = [1, 1]} : vector<2x128xf32> to vector<2x32xf32>
    %238 = arith.negf %237 : vector<2x32xf32>
    %239 = math.exp %238 : vector<2x32xf32>
    %cst_74 = arith.constant 1.000000e+00 : f32
    %240 = vector.broadcast %cst_74 : f32 to vector<2x32xf32>
    %241 = arith.addf %240, %239 : vector<2x32xf32>
    %242 = arith.divf %240, %241 : vector<2x32xf32>
    %243 = arith.mulf %234, %204 : vector<2x32xf32>
    %244 = arith.mulf %228, %236 : vector<2x32xf32>
    %245 = arith.addf %243, %244 : vector<2x32xf32>
    %246 = math.tanh %245 : vector<2x32xf32>
    %247 = arith.mulf %242, %246 : vector<2x32xf32>
    %248 = vector.shape_cast %247 : vector<2x32xf32> to vector<1x2x32xf32>
    %c0_75 = arith.constant 0 : index
    %249 = arith.index_cast %215 : i32 to index
    %c0_76 = arith.constant 0 : index
    %c0_77 = arith.constant 0 : index
    %250 = vector.load %arg4[%c0_75, %249, %c0_76, %c0_77] : memref<1x8x2x32xf32, #tpu.memory_space<vmem>>, vector<1x1x2x32xf32>
    %251 = vector.shape_cast %250 : vector<1x1x2x32xf32> to vector<1x2x32xf32>
    %252 = vector.shape_cast %248 : vector<1x2x32xf32> to vector<1x1x2x32xf32>
    tpu.vector_store %arg4[%c0_75, %249, %c0_76, %c0_77], %252 {strides = array<i32>} : memref<1x8x2x32xf32, #tpu.memory_space<vmem>>, vector<1x1x2x32xf32>,
    %c6_i32 = arith.constant 6 : i32
    %c2_i32_78 = arith.constant 2 : i32
    %253 = arith.muli %c2_i32_78, %c6_i32 : i32
    %c7_i32_79 = arith.constant 7 : i32
    %254 = arith.subi %c7_i32_79, %253 : i32
    %255 = arith.muli %arg0, %254 : i32
    %256 = arith.addi %c6_i32, %255 : i32
    %c0_80 = arith.constant 0 : index
    %257 = arith.index_cast %256 : i32 to index
    %c0_81 = arith.constant 0 : index
    %c0_82 = arith.constant 0 : index
    %258 = vector.load %arg2[%c0_80, %257, %c0_81, %c0_82] : memref<1x8x2x128xf32, #tpu.memory_space<vmem>>, vector<1x1x2x128xf32>
    %259 = vector.shape_cast %258 : vector<1x1x2x128xf32> to vector<1x2x128xf32>
    %260 = vector.shape_cast %259 : vector<1x2x128xf32> to vector<2x128xf32>
    %261 = arith.truncf %247 : vector<2x32xf32> to vector<2x32xbf16>
    %cst_83 = arith.constant dense<0.000000e+00> : vector<2x128xf32>
    %262 = tpu.matmul %261, %4, %cst_83 {dimension_numbers = #tpu.dot_dimension_numbers<[1], [0], [0], [1], [0, 0, 1, 1], [], []>} : vector<2x32xbf16>, vector<32x128xbf16>, vector<2x128xf32> -> vector<2x128xf32>
    %263 = arith.addf %260, %262 : vector<2x128xf32>
    %264 = vector.extract_strided_slice %263 {offsets = [0, 0], sizes = [2, 32], strides = [1, 1]} : vector<2x128xf32> to vector<2x32xf32>
    %265 = arith.negf %264 : vector<2x32xf32>
    %266 = math.exp %265 : vector<2x32xf32>
    %cst_84 = arith.constant 1.000000e+00 : f32
    %267 = vector.broadcast %cst_84 : f32 to vector<2x32xf32>
    %268 = arith.addf %267, %266 : vector<2x32xf32>
    %269 = arith.divf %267, %268 : vector<2x32xf32>
    %270 = vector.extract_strided_slice %263 {offsets = [0, 32], sizes = [2, 32], strides = [1, 1]} : vector<2x128xf32> to vector<2x32xf32>
    %271 = arith.negf %270 : vector<2x32xf32>
    %272 = math.exp %271 : vector<2x32xf32>
    %cst_85 = arith.constant 1.000000e+00 : f32
    %273 = vector.broadcast %cst_85 : f32 to vector<2x32xf32>
    %274 = arith.addf %273, %272 : vector<2x32xf32>
    %275 = arith.divf %273, %274 : vector<2x32xf32>
    %276 = vector.extract_strided_slice %263 {offsets = [0, 64], sizes = [2, 32], strides = [1, 1]} : vector<2x128xf32> to vector<2x32xf32>
    %277 = math.tanh %276 : vector<2x32xf32>
    %278 = vector.extract_strided_slice %263 {offsets = [0, 96], sizes = [2, 32], strides = [1, 1]} : vector<2x128xf32> to vector<2x32xf32>
    %279 = arith.negf %278 : vector<2x32xf32>
    %280 = math.exp %279 : vector<2x32xf32>
    %cst_86 = arith.constant 1.000000e+00 : f32
    %281 = vector.broadcast %cst_86 : f32 to vector<2x32xf32>
    %282 = arith.addf %281, %280 : vector<2x32xf32>
    %283 = arith.divf %281, %282 : vector<2x32xf32>
    %284 = arith.mulf %275, %245 : vector<2x32xf32>
    %285 = arith.mulf %269, %277 : vector<2x32xf32>
    %286 = arith.addf %284, %285 : vector<2x32xf32>
    %287 = math.tanh %286 : vector<2x32xf32>
    %288 = arith.mulf %283, %287 : vector<2x32xf32>
    %289 = vector.shape_cast %288 : vector<2x32xf32> to vector<1x2x32xf32>
    %c0_87 = arith.constant 0 : index
    %290 = arith.index_cast %256 : i32 to index
    %c0_88 = arith.constant 0 : index
    %c0_89 = arith.constant 0 : index
    %291 = vector.load %arg4[%c0_87, %290, %c0_88, %c0_89] : memref<1x8x2x32xf32, #tpu.memory_space<vmem>>, vector<1x1x2x32xf32>
    %292 = vector.shape_cast %291 : vector<1x1x2x32xf32> to vector<1x2x32xf32>
    %293 = vector.shape_cast %289 : vector<1x2x32xf32> to vector<1x1x2x32xf32>
    tpu.vector_store %arg4[%c0_87, %290, %c0_88, %c0_89], %293 {strides = array<i32>} : memref<1x8x2x32xf32, #tpu.memory_space<vmem>>, vector<1x1x2x32xf32>,
    %c7_i32_90 = arith.constant 7 : i32
    %c2_i32_91 = arith.constant 2 : i32
    %294 = arith.muli %c2_i32_91, %c7_i32_90 : i32
    %c7_i32_92 = arith.constant 7 : i32
    %295 = arith.subi %c7_i32_92, %294 : i32
    %296 = arith.muli %arg0, %295 : i32
    %297 = arith.addi %c7_i32_90, %296 : i32
    %c0_93 = arith.constant 0 : index
    %298 = arith.index_cast %297 : i32 to index
    %c0_94 = arith.constant 0 : index
    %c0_95 = arith.constant 0 : index
    %299 = vector.load %arg2[%c0_93, %298, %c0_94, %c0_95] : memref<1x8x2x128xf32, #tpu.memory_space<vmem>>, vector<1x1x2x128xf32>
    %300 = vector.shape_cast %299 : vector<1x1x2x128xf32> to vector<1x2x128xf32>
    %301 = vector.shape_cast %300 : vector<1x2x128xf32> to vector<2x128xf32>
    %302 = arith.truncf %288 : vector<2x32xf32> to vector<2x32xbf16>
    %cst_96 = arith.constant dense<0.000000e+00> : vector<2x128xf32>
    %303 = tpu.matmul %302, %4, %cst_96 {dimension_numbers = #tpu.dot_dimension_numbers<[1], [0], [0], [1], [0, 0, 1, 1], [], []>} : vector<2x32xbf16>, vector<32x128xbf16>, vector<2x128xf32> -> vector<2x128xf32>
    %304 = arith.addf %301, %303 : vector<2x128xf32>
    %305 = vector.extract_strided_slice %304 {offsets = [0, 0], sizes = [2, 32], strides = [1, 1]} : vector<2x128xf32> to vector<2x32xf32>
    %306 = arith.negf %305 : vector<2x32xf32>
    %307 = math.exp %306 : vector<2x32xf32>
    %cst_97 = arith.constant 1.000000e+00 : f32
    %308 = vector.broadcast %cst_97 : f32 to vector<2x32xf32>
    %309 = arith.addf %308, %307 : vector<2x32xf32>
    %310 = arith.divf %308, %309 : vector<2x32xf32>
    %311 = vector.extract_strided_slice %304 {offsets = [0, 32], sizes = [2, 32], strides = [1, 1]} : vector<2x128xf32> to vector<2x32xf32>
    %312 = arith.negf %311 : vector<2x32xf32>
    %313 = math.exp %312 : vector<2x32xf32>
    %cst_98 = arith.constant 1.000000e+00 : f32
    %314 = vector.broadcast %cst_98 : f32 to vector<2x32xf32>
    %315 = arith.addf %314, %313 : vector<2x32xf32>
    %316 = arith.divf %314, %315 : vector<2x32xf32>
    %317 = vector.extract_strided_slice %304 {offsets = [0, 64], sizes = [2, 32], strides = [1, 1]} : vector<2x128xf32> to vector<2x32xf32>
    %318 = math.tanh %317 : vector<2x32xf32>
    %319 = vector.extract_strided_slice %304 {offsets = [0, 96], sizes = [2, 32], strides = [1, 1]} : vector<2x128xf32> to vector<2x32xf32>
    %320 = arith.negf %319 : vector<2x32xf32>
    %321 = math.exp %320 : vector<2x32xf32>
    %cst_99 = arith.constant 1.000000e+00 : f32
    %322 = vector.broadcast %cst_99 : f32 to vector<2x32xf32>
    %323 = arith.addf %322, %321 : vector<2x32xf32>
    %324 = arith.divf %322, %323 : vector<2x32xf32>
    %325 = arith.mulf %316, %286 : vector<2x32xf32>
    %326 = arith.mulf %310, %318 : vector<2x32xf32>
    %327 = arith.addf %325, %326 : vector<2x32xf32>
    %328 = math.tanh %327 : vector<2x32xf32>
    %329 = arith.mulf %324, %328 : vector<2x32xf32>
    %330 = vector.shape_cast %329 : vector<2x32xf32> to vector<1x2x32xf32>
    %c0_100 = arith.constant 0 : index
    %331 = arith.index_cast %297 : i32 to index
    %c0_101 = arith.constant 0 : index
    %c0_102 = arith.constant 0 : index
    %332 = vector.load %arg4[%c0_100, %331, %c0_101, %c0_102] : memref<1x8x2x32xf32, #tpu.memory_space<vmem>>, vector<1x1x2x32xf32>
    %333 = vector.shape_cast %332 : vector<1x1x2x32xf32> to vector<1x2x32xf32>
    %334 = vector.shape_cast %330 : vector<1x2x32xf32> to vector<1x1x2x32xf32>
    tpu.vector_store %arg4[%c0_100, %331, %c0_101, %c0_102], %334 {strides = array<i32>} : memref<1x8x2x32xf32, #tpu.memory_space<vmem>>, vector<1x1x2x32xf32>,
    %c8_i32 = arith.constant 8 : i32
    %c0_103 = arith.constant 0 : index
    %c0_104 = arith.constant 0 : index
    %335 = vector.load %arg5[%c0_103, %c0_104] : memref<2x32xf32, #tpu.memory_space<vmem>>, vector<2x32xf32>
    tpu.vector_store %arg5[%c0_103, %c0_104], %329 {strides = array<i32>} : memref<2x32xf32, #tpu.memory_space<vmem>>, vector<2x32xf32>,
    %c0_105 = arith.constant 0 : index
    %c0_106 = arith.constant 0 : index
    %336 = vector.load %arg6[%c0_105, %c0_106] : memref<2x32xf32, #tpu.memory_space<vmem>>, vector<2x32xf32>
    tpu.vector_store %arg6[%c0_105, %c0_106], %327 {strides = array<i32>} : memref<2x32xf32, #tpu.memory_space<vmem>>, vector<2x32xf32>,
    return
  }
  func.func @transform_0(%arg0: i32, %arg1: i32) -> (i32, i32, i32, i32) {
    %c2_i32 = arith.constant 2 : i32
    %0 = arith.muli %c2_i32, %arg1 : i32
    %c0_i32 = arith.constant 0 : i32
    %1 = arith.subi %c0_i32, %0 : i32
    %2 = arith.muli %arg0, %1 : i32
    %3 = arith.addi %arg1, %2 : i32
    %c0_i32_0 = arith.constant 0 : i32
    %c0_i32_1 = arith.constant 0 : i32
    %c0_i32_2 = arith.constant 0 : i32
    return %arg0, %3, %c0_i32_0, %c0_i32_1 : i32, i32, i32, i32
  }
  func.func @transform_1(%arg0: i32, %arg1: i32) -> (i32, i32, i32) {
    %c0_i32 = arith.constant 0 : i32
    %c0_i32_0 = arith.constant 0 : i32
    %c0_i32_1 = arith.constant 0 : i32
    return %arg0, %c0_i32, %c0_i32_0 : i32, i32, i32
  }
  func.func @transform_2(%arg0: i32, %arg1: i32) -> (i32, i32, i32, i32) {
    %c2_i32 = arith.constant 2 : i32
    %0 = arith.muli %c2_i32, %arg1 : i32
    %c0_i32 = arith.constant 0 : i32
    %1 = arith.subi %c0_i32, %0 : i32
    %2 = arith.muli %arg0, %1 : i32
    %3 = arith.addi %arg1, %2 : i32
    %c0_i32_0 = arith.constant 0 : i32
    %c0_i32_1 = arith.constant 0 : i32
    %c0_i32_2 = arith.constant 0 : i32
    return %arg0, %3, %c0_i32_0, %c0_i32_1 : i32, i32, i32, i32
  }
}

</mosaic_0001>

<llo_original>
// kernel: recurrent_encoder_forward.3
$region0: #{recurrent_encoder_forward.3}
  #allocation0 [shape = 'u32[]', space=smem, size = 0x4, offset = 0x4, fixed_abs, tag = 'smem constant byte address 0x4 - core index']
  #allocation1 [shape = 'u32[144,128]{1,0:T(1,128)}', space=vmem, size = 0x12000, scoped, tag = 'internal scratch']
  #allocation2 [shape = 'f32[2,32]{1,0:T(2,128)}', space=vmem, size = 0x400, scoped, tag = 'scratch operand']
  #allocation3 [shape = 'f32[2,32]{1,0:T(2,128)}', space=vmem, size = 0x400, scoped, tag = 'scratch operand']
  %s0 = inlined_call_operand.vmem [shape: f32[2,8,2,128], index: 0, kind: input, shape index: {}]
  %s1 = inlined_call_operand.vmem [shape: bf16[2,32,128], index: 1, kind: input, shape index: {}]
  %s2 = inlined_call_operand.vmem [shape: f32[2,8,2,32], index: 2, kind: output, shape index: {}]
  %s3 = sld [smem:[#allocation0]]
  $region45: #{recurrent_encoder_forward.3} parent=0
    _
  %s5 = ssub.s32 1, %s3
  %s6 = scalar_select 0, %s5, %s3
  loop: start=0, step=1, limit=4
  $region2: #{recurrent_encoder_forward.3} parent=0 // loop_pre_header
    _
  $region3: #{recurrent_encoder_forward.3} parent=0 // loop_header
    %s8 = sphi 0, %s12
    %p9 = scmp.ge.s32.totalorder %s8, 4
    %s15 = sphi 0, %s27
    %s16 = sphi 0, %s23
    %s17 = sphi 0, %s15
    %s18 = sphi 0, %s16
    %s19 = sphi 0, %s17
    %s20 = sphi 0, %s18
    %s40 = sphi 0, %s42
    %s43 = sphi 0, %s40
    %s44 = sphi 0, %s43
    %s60 = sphi 0, %s44
    %s66 = sphi 0, %s68
    %s69 = sphi 0, %s66
    %s70 = sphi 0, %s69
    %s86 = sphi 0, %s70
    %s102 = sphi 0, %s104
    %s105 = sphi 0, %s102
    %s106 = sphi 0, %s105
    %s122 = sphi 0, %s106
  $region4: #{recurrent_encoder_forward.3} parent=0 // loop_header_branch
    %11 = sbr.rel (%p9) target = $region8
  $region5: #{recurrent_encoder_forward.3} parent=0 // loop_body
    %s13 = ssub.s32 %s8, 1
    %s14 = ssub.s32 %s8, 2
    %s21 = sadd.s32 1, %s16
    %p22 = scmp.ge.s32.totalorder %s21, 1
    %s23 = scalar_select %p22, 0, %s21
    %s24 = sadd.s32 1, %s15
    %s25 = scalar_select %p22, %s24, %s15
    %p26 = scmp.ge.s32.totalorder %s25, 2
    %s27 = scalar_select %p26, 0, %s25
    %s28 = smul.u32 %s16, 2
    %s29 = ssub.s32 0, %s28
    %s30 = smul.u32 %s15, %s29
    %s31 = sadd.s32 %s16, %s30
    %s32 = smul.u32 %s23, 2
    %s33 = ssub.s32 0, %s32
    %s34 = smul.u32 %s27, %s33
    %s35 = sadd.s32 %s23, %s34
    %s36 = ssub.s32 %s15, %s27
    %s37 = ssub.s32 %s31, %s35
    %s38 = sor.u32 %s36, %s37
    %p39 = scmp.eq.s32.totalorder %s38, 0
    %s41 = sadd.s32 %s40, 1
    %s42 = scalar_select %p39, %s40, %s41
    %p45 = pneg %p39
    %p46 = scmp.eq.s32.totalorder %s8, 1
    %p47 = por %p45, %p46
    %p48 = scmp.ne.s32.totalorder %s40, %s43
    %p49 = scmp.eq.s32.totalorder %s8, 0
    %p50 = por %p48, %p49
    %p51 = scmp.ne.s32.totalorder %s40, %s43
    %p52 = scmp.eq.s32.totalorder %s13, 1
    %p53 = por %p51, %p52
    %p54 = scmp.ne.s32.totalorder %s43, %s44
    %p55 = scmp.eq.s32.totalorder %s13, 0
    %p56 = por %p54, %p55
    %p57 = scmp.ne.s32.totalorder %s43, %s44
    %p58 = scmp.eq.s32.totalorder %s14, 1
    %p59 = por %p57, %p58
    %p61 = scmp.ne.s32.totalorder %s44, %s60
    %p62 = scmp.eq.s32.totalorder %s14, 0
    %p63 = por %p61, %p62
    %s64 = ssub.s32 %s15, %s27
    %p65 = scmp.eq.s32.totalorder %s64, 0
    %s67 = sadd.s32 %s66, 1
    %s68 = scalar_select %p65, %s66, %s67
    %p71 = pneg %p65
    %p72 = scmp.eq.s32.totalorder %s8, 1
    %p73 = por %p71, %p72
    %p74 = scmp.ne.s32.totalorder %s66, %s69
    %p75 = scmp.eq.s32.totalorder %s8, 0
    %p76 = por %p74, %p75
    %p77 = scmp.ne.s32.totalorder %s66, %s69
    %p78 = scmp.eq.s32.totalorder %s13, 1
    %p79 = por %p77, %p78
    %p80 = scmp.ne.s32.totalorder %s69, %s70
    %p81 = scmp.eq.s32.totalorder %s13, 0
    %p82 = por %p80, %p81
    %p83 = scmp.ne.s32.totalorder %s69, %s70
    %p84 = scmp.eq.s32.totalorder %s14, 1
    %p85 = por %p83, %p84
    %p87 = scmp.ne.s32.totalorder %s70, %s86
    %p88 = scmp.eq.s32.totalorder %s14, 0
    %p89 = por %p87, %p88
    %s90 = smul.u32 %s16, 2
    %s91 = ssub.s32 0, %s90
    %s92 = smul.u32 %s15, %s91
    %s93 = sadd.s32 %s16, %s92
    %s94 = smul.u32 %s23, 2
    %s95 = ssub.s32 0, %s94
    %s96 = smul.u32 %s27, %s95
    %s97 = sadd.s32 %s23, %s96
    %s98 = ssub.s32 %s15, %s27
    %s99 = ssub.s32 %s93, %s97
    %s100 = sor.u32 %s98, %s99
    %p101 = scmp.eq.s32.totalorder %s100, 0
    %s103 = sadd.s32 %s102, 1
    %s104 = scalar_select %p101, %s102, %s103
    %p107 = pneg %p101
    %p108 = scmp.eq.s32.totalorder %s8, 1
    %p109 = por %p107, %p108
    %p110 = scmp.ne.s32.totalorder %s102, %s105
    %p111 = scmp.eq.s32.totalorder %s8, 0
    %p112 = por %p110, %p111
    %p113 = scmp.ne.s32.totalorder %s102, %s105
    %p114 = scmp.eq.s32.totalorder %s13, 1
    %p115 = por %p113, %p114
    %p116 = scmp.ne.s32.totalorder %s105, %s106
    %p117 = scmp.eq.s32.totalorder %s13, 0
    %p118 = por %p116, %p117
    %p119 = scmp.ne.s32.totalorder %s105, %s106
    %p120 = scmp.eq.s32.totalorder %s14, 1
    %p121 = por %p119, %p120
    %p123 = scmp.ne.s32.totalorder %s106, %s122
    %p124 = scmp.eq.s32.totalorder %s14, 0
    %p125 = por %p123, %p124
    %p126 = scmp.le.s32.totalorder 1, %s8
    %p127 = scmp.lt.s32.totalorder %s8, 3
    %p128 = pnand %p126, %p127
    %p129 = pneg %p128
    // Predicated region
    $region9: #{recurrent_encoder_forward.3} parent=5 // pred_check
      _
    $region10: #{recurrent_encoder_forward.3} parent=5 // pred_check_branch
      %131 = sbr.rel (%p128) target = $region12
    $region11: #{recurrent_encoder_forward.3} parent=5 // pred_region
      %s132 = ssub.s32 %s8, 1
    $region12: #{recurrent_encoder_forward.3} parent=5 // pred_fallthru
      _
    %p133 = scmp.lt.s32.totalorder %s8, 2
    // Predicated region
    $region13: #{recurrent_encoder_forward.3} parent=5 // pred_check
      %p134 = pneg %p133
    $region14: #{recurrent_encoder_forward.3} parent=5 // pred_check_branch
      %136 = sbr.rel (%p134) target = $region16
    $region15: #{recurrent_encoder_forward.3} parent=5 // pred_region
      // Predicated region
      $region17: #{recurrent_encoder_forward.3} parent=15 // pred_check
        %p137 = pneg %p50
      $region18: #{recurrent_encoder_forward.3} parent=15 // pred_check_branch
        %139 = sbr.rel (%p137) target = $region20
      $region19: #{recurrent_encoder_forward.3} parent=15 // pred_region
        %s140 = smul.u32 %s16, 2
        %s141 = ssub.s32 0, %s140
        %s142 = smul.u32 %s15, %s141
        %s143 = sadd.s32 %s16, %s142
        %s144 = smul.u32 8, %s143
        %p145 = scmp.lt.s32.totalorder %s15, 1
        %s146 = scalar_select %p145, %s15, 1
        %p147 = scmp.lt.s32.totalorder %s144, 7
        %s148 = scalar_select %p147, %s144, 7
        %s149 = smul.addr %s146, 8
        %s150 = sadd.s32 %s148, %s149
        %s151 = smul.addr %s150, 2
        %s152 = scalar_lea.vmem %s0, %s151
        %s153 = smul.u32 %s16, 2
        %s154 = ssub.s32 0, %s153
        %s155 = smul.u32 %s15, %s154
        %s156 = sadd.s32 %s16, %s155
        %s157 = smul.u32 8, %s156
      $region20: #{recurrent_encoder_forward.3} parent=15 // pred_fallthru
        _
      // Predicated region
      $region21: #{recurrent_encoder_forward.3} parent=15 // pred_check
        %p158 = pneg %p76
      $region22: #{recurrent_encoder_forward.3} parent=15 // pred_check_branch
        %160 = sbr.rel (%p158) target = $region24
      $region23: #{recurrent_encoder_forward.3} parent=15 // pred_region
        %p161 = scmp.lt.s32.totalorder %s15, 1
        %s162 = scalar_select %p161, %s15, 1
        %s163 = smul.addr %s162, 4
        %s164 = smul.addr %s163, 4
        %s165 = scalar_lea.vmem %s1, %s164
      $region24: #{recurrent_encoder_forward.3} parent=15 // pred_fallthru
        _
    $region16: #{recurrent_encoder_forward.3} parent=5 // pred_fallthru
      _
    %p166 = scmp.le.s32.totalorder 1, %s8
    %p167 = scmp.lt.s32.totalorder %s8, 3
    %p168 = pnand %p166, %p167
    %p169 = pneg %p168
    // Predicated region
    $region25: #{recurrent_encoder_forward.3} parent=5 // pred_check
      _
    $region26: #{recurrent_encoder_forward.3} parent=5 // pred_check_branch
      %171 = sbr.rel (%p168) target = $region28
    $region27: #{recurrent_encoder_forward.3} parent=5 // pred_region
      %s172 = ssub.s32 %s8, 1
      %s173 = smul.u32 %s18, 2
      %s174 = ssub.s32 0, %s173
      %s175 = smul.u32 %s17, %s174
      %s176 = sadd.s32 %s18, %s175
      %s177 = smul.u32 8, %s176
      %p178 = scmp.lt.s32.totalorder %s17, 1
      %s179 = scalar_select %p178, %s17, 1
      %p180 = scmp.lt.s32.totalorder %s177, 7
      %s181 = scalar_select %p180, %s177, 7
      %s182 = smul.addr %s179, 8
      %s183 = sadd.s32 %s181, %s182
      %s184 = smul.addr %s183, 2
      %s185 = scalar_lea.vmem %s0, %s184
      %p186 = pneg %p56
      %p187 = pneg %p53
      %p188 = scmp.lt.s32.totalorder %s17, 1
      %s189 = scalar_select %p188, %s17, 1
      %s190 = smul.addr %s189, 4
      %s191 = smul.addr %s190, 4
      %s192 = scalar_lea.vmem %s1, %s191
      %p193 = pneg %p82
      %p194 = pneg %p79
      %p195 = pneg %p118
      %p196 = pneg %p115
      %s197 = smul.u32 %s18, 2
      %s198 = ssub.s32 0, %s197
      %s199 = smul.u32 %s17, %s198
      %s200 = sadd.s32 %s18, %s199
      %s201 = smul.u32 8, %s200
      %p202 = scmp.lt.s32.totalorder %s17, 1
      %s203 = scalar_select %p202, %s17, 1
      %p204 = scmp.lt.s32.totalorder %s201, 7
      %s205 = scalar_select %p204, %s201, 7
      %s206 = smul.addr %s203, 8
      %s207 = sadd.s32 %s205, %s206
      %s208 = smul.addr %s207, 2
      %s209 = scalar_lea.vmem %s2, %s208
      %s210 = smul.u32 %s18, 2
      %s211 = ssub.s32 0, %s210
      %s212 = smul.u32 %s17, %s211
      %s213 = sadd.s32 %s18, %s212
      %s214 = smul.u32 8, %s213
      %p215 = scmp.lt.s32.totalorder %s17, 1
      %s216 = scalar_select %p215, %s17, 1
      %p217 = scmp.lt.s32.totalorder %s214, 7
      %s218 = scalar_select %p217, %s214, 7
      %s219 = smul.addr %s216, 8
      %s220 = sadd.s32 %s218, %s219
      %s221 = smul.addr %s220, 2
      %s222 = scalar_lea.vmem %s0, %s221
      %s223 = smul.u32 %s18, 2
      %s224 = ssub.s32 0, %s223
      %s225 = smul.u32 %s17, %s224
      %s226 = sadd.s32 %s18, %s225
      %s227 = smul.u32 8, %s226
      %p228 = scmp.lt.s32.totalorder %s17, 1
      %s229 = scalar_select %p228, %s17, 1
      %s230 = smul.addr %s229, 4
      %s231 = smul.addr %s230, 4
      %s232 = scalar_lea.vmem %s1, %s231
      %s233 = smul.u32 %s18, 2
      %s234 = ssub.s32 0, %s233
      %s235 = smul.u32 %s17, %s234
      %s236 = sadd.s32 %s18, %s235
      %s237 = smul.u32 8, %s236
      %p238 = scmp.lt.s32.totalorder %s17, 1
      %s239 = scalar_select %p238, %s17, 1
      %p240 = scmp.lt.s32.totalorder %s237, 7
      %s241 = scalar_select %p240, %s237, 7
      %s242 = smul.addr %s239, 8
      %s243 = sadd.s32 %s241, %s242
      %s244 = smul.addr %s243, 2
      %s245 = scalar_lea.vmem %s2, %s244
      %s246 = smul.u32 %s18, 2
      %s247 = ssub.s32 0, %s246
      %s248 = smul.u32 %s17, %s247
      %s249 = sadd.s32 %s18, %s248
      %s250 = smul.u32 8, %s249
      %p252 = scmp.eq.s32.totalorder %s18, 0
      // Predicated region
      $region29: #{recurrent_encoder_forward.3} parent=27 // pred_check
        %p253 = pneg %p252
      $region30: #{recurrent_encoder_forward.3} parent=27 // pred_check_branch
        %255 = sbr.rel (%p253) target = $region32
      $region31: #{recurrent_encoder_forward.3} parent=27 // pred_region
        %vm256 = vcmask 254976
        %257 = vst.msk [vmem:[#allocation2] sm:$0x3] %vm256, 0.0
        %258 = vst.msk [vmem:[#allocation3] sm:$0x3] %vm256, 0.0
      $region32: #{recurrent_encoder_forward.3} parent=27 // pred_fallthru
        _
      %v259 = vld [vmem:[%s232] sm:$0xf]
      %v260 = vld [vmem:[%s232 + $0x4] sm:$0xf]
      %v261 = vld [vmem:[%s232 + $0x8] sm:$0xf]
      %v262 = vld [vmem:[%s232 + $0xc] sm:$0xf]
      %v263 = vld [vmem:[#allocation2] sm:$0x3]
      %v264 = vld [vmem:[#allocation3] sm:$0x3]
      %s265 = smul.u32 %s17, 7
      %s266 = smul.u32 %s265, 2
      %s267 = scalar_lea.vmem %s222, %s266
      %v268 = vld [vmem:[%s267] sm:$0x3]
      %v269 = vpack.c.bf16 %v263, %v263
      %v274 = vunpack.c.l.b16 %v259
      %v275 = vunpack.c.l.b16 %v260
      %v276 = vunpack.c.l.b16 %v261
      %v277 = vunpack.c.l.b16 %v262
      %v278 = vpack.c.b16 %v275, %v274
      %v279 = vpack.c.b16 %v277, %v276
      %vm282 = vcmask 261120
      %v284 = vsel %vm282, %v269, 0
      %286 = vmatprep.subr.bf16.mxu0 0
      %287 = vmatpush1.bf16.msra.mxu0 %v278
      %288 = vmatprep.subr.bf16.mxu0 0
      %289 = vmatpush1.bf16.msra.mxu0 %v279
      %290 = vmatprep.subr.bf16.mxu0 0
      %291 = vmatpush1.bf16.msra.mxu0 0
      %292 = vmatprep.subr.bf16.mxu0 0
      %293 = vmatpush1.bf16.msra.mxu0 0
      %294 = vmatprep.subr.bf16.mxu0 0
      %295 = vmatpush1.bf16.msra.mxu0 0
      %296 = vmatprep.subr.bf16.mxu0 0
      %297 = vmatpush1.bf16.msra.mxu0 0
      %298 = vmatprep.subr.bf16.mxu0 0
      %299 = vmatpush1.bf16.msra.mxu0 0
      %300 = vmatprep.subr.bf16.mxu0 0
      %301 = vmatpush1.bf16.msra.mxu0 0
      %302 = vmatprep.subr.bf16.mxu0 0
      %303 = vmatpush1.bf16.msra.mxu0 0
      %304 = vmatprep.subr.bf16.mxu0 0
      %305 = vmatpush1.bf16.msra.mxu0 0
      %306 = vmatprep.subr.bf16.mxu0 0
      %307 = vmatpush1.bf16.msra.mxu0 0
      %308 = vmatprep.subr.bf16.mxu0 0
      %309 = vmatpush1.bf16.msra.mxu0 0
      %310 = vmatprep.subr.bf16.mxu0 0
      %311 = vmatpush1.bf16.msra.mxu0 0
      %312 = vmatprep.subr.bf16.mxu0 0
      %313 = vmatpush1.bf16.msra.mxu0 0
      %314 = vmatprep.subr.bf16.mxu0 0
      %315 = vmatpush1.bf16.msra.mxu0 0
      %316 = vmatprep.subr.bf16.mxu0 0
      %317 = vmatpush1.bf16.msra.mxu0 0
      %318 = vmatprep.mubr.bf16.mxu0 0
      %319 = vmatmul.mubr.bf16.gmra.mrb[0].mxu0 %v284
      %v320 = vpop.f32.mrb[0].mxu0
      %v321 = vadd.f32 0.0, %v320
      %v322 = vpop.f32.mrb[0].mxu0
      %v323 = vpop.f32.mrb[0].mxu0
      %v324 = vpop.f32.mrb[0].mxu0
      %325 = vdwg.mxu0
      %v326 = vadd.f32 %v268, %v321
      %v327 = vxor.u32 %v326, 2147483648
      %v328 = vmul.f32 %v327, 1.442695
      %v329 = vpow.pop %v328
      %v330 = vadd.f32 %v329, 1.0
      %v331 = vrcp.pop %v330
      %v332 = vmul.f32 1.0, %v331
      %v333 = vtanh.pop %v326
      %335 = vrot.lane.b32.xlu0 %v264, 32
      %v336 = vpop.permute.xlu0 %335
      %v338 = vmul.f32 %v332, %v336
      %340 = vrot.lane.b32.xlu0 %v333, 64
      %v341 = vpop.permute.xlu0 %340
      %v343 = vmul.f32 %v332, %v341
      %345 = vrot.lane.b32.xlu0 %v343, 32
      %v346 = vpop.permute.xlu0 %345
      %v348 = vadd.f32 %v338, %v346
      %v349 = vtanh.pop %v348
      %351 = vrot.lane.b32.xlu0 %v349, 64
      %v352 = vpop.permute.xlu0 %351
      %v354 = vmul.f32 %v332, %v352
      %356 = vrot.lane.b32.xlu0 %v354, 32
      %v357 = vpop.permute.xlu0 %356
      %s359 = scalar_lea.vmem %s245, %s266
      %vm360 = vcmask 254976
      %361 = vst.msk [vmem:[%s359] sm:$0x3] %vm360, %v357
      %s362 = smul.u32 %s17, 5
      %s363 = sadd.s32 %s362, 1
      %s364 = smul.u32 %s363, 2
      %s365 = scalar_lea.vmem %s222, %s364
      %v366 = vld [vmem:[%s365] sm:$0x3]
      %v367 = vpack.c.bf16 %v354, %v354
      %369 = vrot.lane.b32.xlu0 %v367, 32
      %v370 = vpop.permute.xlu0 %369
      %v372 = vsel %vm282, %v370, 0
      %374 = vmatprep.subr.bf16.mxu0 0
      %375 = vmatpush1.bf16.msra.mxu0 %v278
      %376 = vmatprep.subr.bf16.mxu0 0
      %377 = vmatpush1.bf16.msra.mxu0 %v279
      %378 = vmatprep.subr.bf16.mxu0 0
      %379 = vmatpush1.bf16.msra.mxu0 0
      %380 = vmatprep.subr.bf16.mxu0 0
      %381 = vmatpush1.bf16.msra.mxu0 0
      %382 = vmatprep.subr.bf16.mxu0 0
      %383 = vmatpush1.bf16.msra.mxu0 0
      %384 = vmatprep.subr.bf16.mxu0 0
      %385 = vmatpush1.bf16.msra.mxu0 0
      %386 = vmatprep.subr.bf16.mxu0 0
      %387 = vmatpush1.bf16.msra.mxu0 0
      %388 = vmatprep.subr.bf16.mxu0 0
      %389 = vmatpush1.bf16.msra.mxu0 0
      %390 = vmatprep.subr.bf16.mxu0 0
      %391 = vmatpush1.bf16.msra.mxu0 0
      %392 = vmatprep.subr.bf16.mxu0 0
      %393 = vmatpush1.bf16.msra.mxu0 0
      %394 = vmatprep.subr.bf16.mxu0 0
      %395 = vmatpush1.bf16.msra.mxu0 0
      %396 = vmatprep.subr.bf16.mxu0 0
      %397 = vmatpush1.bf16.msra.mxu0 0
      %398 = vmatprep.subr.bf16.mxu0 0
      %399 = vmatpush1.bf16.msra.mxu0 0
      %400 = vmatprep.subr.bf16.mxu0 0
      %401 = vmatpush1.bf16.msra.mxu0 0
      %402 = vmatprep.subr.bf16.mxu0 0
      %403 = vmatpush1.bf16.msra.mxu0 0
      %404 = vmatprep.subr.bf16.mxu0 0
      %405 = vmatpush1.bf16.msra.mxu0 0
      %406 = vmatprep.mubr.bf16.mxu0 0
      %407 = vmatmul.mubr.bf16.gmra.mrb[0].mxu0 %v372
      %v408 = vpop.f32.mrb[0].mxu0
      %v409 = vadd.f32 0.0, %v408
      %v410 = vpop.f32.mrb[0].mxu0
      %v411 = vpop.f32.mrb[0].mxu0
      %v412 = vpop.f32.mrb[0].mxu0
      %413 = vdwg.mxu0
      %v414 = vadd.f32 %v366, %v409
      %v415 = vxor.u32 %v414, 2147483648
      %v416 = vmul.f32 %v415, 1.442695
      %v417 = vpow.pop %v416
      %v418 = vadd.f32 %v417, 1.0
      %v419 = vrcp.pop %v418
      %v420 = vmul.f32 1.0, %v419
      %v421 = vtanh.pop %v414
      %v422 = vmul.f32 %v420, %v348
      %424 = vrot.lane.b32.xlu0 %v421, 64
      %v425 = vpop.permute.xlu0 %424
      %v427 = vmul.f32 %v420, %v425
      %429 = vrot.lane.b32.xlu0 %v427, 32
      %v430 = vpop.permute.xlu0 %429
      %v432 = vadd.f32 %v422, %v430
      %v433 = vtanh.pop %v432
      %435 = vrot.lane.b32.xlu0 %v433, 64
      %v436 = vpop.permute.xlu0 %435
      %v438 = vmul.f32 %v420, %v436
      %440 = vrot.lane.b32.xlu0 %v438, 32
      %v441 = vpop.permute.xlu0 %440
      %s443 = scalar_lea.vmem %s245, %s364
      %444 = vst.msk [vmem:[%s443] sm:$0x3] %vm360, %v441
      %s445 = smul.u32 %s17, 3
      %s446 = sadd.s32 %s445, 2
      %s447 = smul.u32 %s446, 2
      %s448 = scalar_lea.vmem %s222, %s447
      %v449 = vld [vmem:[%s448] sm:$0x3]
      %v450 = vpack.c.bf16 %v438, %v438
      %452 = vrot.lane.b32.xlu0 %v450, 32
      %v453 = vpop.permute.xlu0 %452
      %v455 = vsel %vm282, %v453, 0
      %457 = vmatprep.subr.bf16.mxu0 0
      %458 = vmatpush1.bf16.msra.mxu0 %v278
      %459 = vmatprep.subr.bf16.mxu0 0
      %460 = vmatpush1.bf16.msra.mxu0 %v279
      %461 = vmatprep.subr.bf16.mxu0 0
      %462 = vmatpush1.bf16.msra.mxu0 0
      %463 = vmatprep.subr.bf16.mxu0 0
      %464 = vmatpush1.bf16.msra.mxu0 0
      %465 = vmatprep.subr.bf16.mxu0 0
      %466 = vmatpush1.bf16.msra.mxu0 0
      %467 = vmatprep.subr.bf16.mxu0 0
      %468 = vmatpush1.bf16.msra.mxu0 0
      %469 = vmatprep.subr.bf16.mxu0 0
      %470 = vmatpush1.bf16.msra.mxu0 0
      %471 = vmatprep.subr.bf16.mxu0 0
      %472 = vmatpush1.bf16.msra.mxu0 0
      %473 = vmatprep.subr.bf16.mxu0 0
      %474 = vmatpush1.bf16.msra.mxu0 0
      %475 = vmatprep.subr.bf16.mxu0 0
      %476 = vmatpush1.bf16.msra.mxu0 0
      %477 = vmatprep.subr.bf16.mxu0 0
      %478 = vmatpush1.bf16.msra.mxu0 0
      %479 = vmatprep.subr.bf16.mxu0 0
      %480 = vmatpush1.bf16.msra.mxu0 0
      %481 = vmatprep.subr.bf16.mxu0 0
      %482 = vmatpush1.bf16.msra.mxu0 0
      %483 = vmatprep.subr.bf16.mxu0 0
      %484 = vmatpush1.bf16.msra.mxu0 0
      %485 = vmatprep.subr.bf16.mxu0 0
      %486 = vmatpush1.bf16.msra.mxu0 0
      %487 = vmatprep.subr.bf16.mxu0 0
      %488 = vmatpush1.bf16.msra.mxu0 0
      %489 = vmatprep.mubr.bf16.mxu0 0
      %490 = vmatmul.mubr.bf16.gmra.mrb[0].mxu0 %v455
      %v491 = vpop.f32.mrb[0].mxu0
      %v492 = vadd.f32 0.0, %v491
      %v493 = vpop.f32.mrb[0].mxu0
      %v494 = vpop.f32.mrb[0].mxu0
      %v495 = vpop.f32.mrb[0].mxu0
      %496 = vdwg.mxu0
      %v497 = vadd.f32 %v449, %v492
      %v498 = vxor.u32 %v497, 2147483648
      %v499 = vmul.f32 %v498, 1.442695
      %v500 = vpow.pop %v499
      %v501 = vadd.f32 %v500, 1.0
      %v502 = vrcp.pop %v501
      %v503 = vmul.f32 1.0, %v502
      %v504 = vtanh.pop %v497
      %v505 = vmul.f32 %v503, %v432
      %507 = vrot.lane.b32.xlu0 %v504, 64
      %v508 = vpop.permute.xlu0 %507
      %v510 = vmul.f32 %v503, %v508
      %512 = vrot.lane.b32.xlu0 %v510, 32
      %v513 = vpop.permute.xlu0 %512
      %v515 = vadd.f32 %v505, %v513
      %v516 = vtanh.pop %v515
      %518 = vrot.lane.b32.xlu0 %v516, 64
      %v519 = vpop.permute.xlu0 %518
      %v521 = vmul.f32 %v503, %v519
      %523 = vrot.lane.b32.xlu0 %v521, 32
      %v524 = vpop.permute.xlu0 %523
      %s526 = scalar_lea.vmem %s245, %s447
      %527 = vst.msk [vmem:[%s526] sm:$0x3] %vm360, %v524
      %s528 = sadd.s32 %s17, 3
      %s529 = smul.u32 %s528, 2
      %s530 = scalar_lea.vmem %s222, %s529
      %v531 = vld [vmem:[%s530] sm:$0x3]
      %v532 = vpack.c.bf16 %v521, %v521
      %534 = vrot.lane.b32.xlu0 %v532, 32
      %v535 = vpop.permute.xlu0 %534
      %v537 = vsel %vm282, %v535, 0
      %539 = vmatprep.subr.bf16.mxu0 0
      %540 = vmatpush1.bf16.msra.mxu0 %v278
      %541 = vmatprep.subr.bf16.mxu0 0
      %542 = vmatpush1.bf16.msra.mxu0 %v279
      %543 = vmatprep.subr.bf16.mxu0 0
      %544 = vmatpush1.bf16.msra.mxu0 0
      %545 = vmatprep.subr.bf16.mxu0 0
      %546 = vmatpush1.bf16.msra.mxu0 0
      %547 = vmatprep.subr.bf16.mxu0 0
      %548 = vmatpush1.bf16.msra.mxu0 0
      %549 = vmatprep.subr.bf16.mxu0 0
      %550 = vmatpush1.bf16.msra.mxu0 0
      %551 = vmatprep.subr.bf16.mxu0 0
      %552 = vmatpush1.bf16.msra.mxu0 0
      %553 = vmatprep.subr.bf16.mxu0 0
      %554 = vmatpush1.bf16.msra.mxu0 0
      %555 = vmatprep.subr.bf16.mxu0 0
      %556 = vmatpush1.bf16.msra.mxu0 0
      %557 = vmatprep.subr.bf16.mxu0 0
      %558 = vmatpush1.bf16.msra.mxu0 0
      %559 = vmatprep.subr.bf16.mxu0 0
      %560 = vmatpush1.bf16.msra.mxu0 0
      %561 = vmatprep.subr.bf16.mxu0 0
      %562 = vmatpush1.bf16.msra.mxu0 0
      %563 = vmatprep.subr.bf16.mxu0 0
      %564 = vmatpush1.bf16.msra.mxu0 0
      %565 = vmatprep.subr.bf16.mxu0 0
      %566 = vmatpush1.bf16.msra.mxu0 0
      %567 = vmatprep.subr.bf16.mxu0 0
      %568 = vmatpush1.bf16.msra.mxu0 0
      %569 = vmatprep.subr.bf16.mxu0 0
      %570 = vmatpush1.bf16.msra.mxu0 0
      %571 = vmatprep.mubr.bf16.mxu0 0
      %572 = vmatmul.mubr.bf16.gmra.mrb[0].mxu0 %v537
      %v573 = vpop.f32.mrb[0].mxu0
      %v574 = vadd.f32 0.0, %v573
      %v575 = vpop.f32.mrb[0].mxu0
      %v576 = vpop.f32.mrb[0].mxu0
      %v577 = vpop.f32.mrb[0].mxu0
      %578 = vdwg.mxu0
      %v579 = vadd.f32 %v531, %v574
      %v580 = vxor.u32 %v579, 2147483648
      %v581 = vmul.f32 %v580, 1.442695
      %v582 = vpow.pop %v581
      %v583 = vadd.f32 %v582, 1.0
      %v584 = vrcp.pop %v583
      %v585 = vmul.f32 1.0, %v584
      %v586 = vtanh.pop %v579
      %v587 = vmul.f32 %v585, %v515
      %589 = vrot.lane.b32.xlu0 %v586, 64
      %v590 = vpop.permute.xlu0 %589
      %v592 = vmul.f32 %v585, %v590
      %594 = vrot.lane.b32.xlu0 %v592, 32
      %v595 = vpop.permute.xlu0 %594
      %v597 = vadd.f32 %v587, %v595
      %v598 = vtanh.pop %v597
      %600 = vrot.lane.b32.xlu0 %v598, 64
      %v601 = vpop.permute.xlu0 %600
      %v603 = vmul.f32 %v585, %v601
      %605 = vrot.lane.b32.xlu0 %v603, 32
      %v606 = vpop.permute.xlu0 %605
      %s608 = scalar_lea.vmem %s245, %s529
      %609 = vst.msk [vmem:[%s608] sm:$0x3] %vm360, %v606
      %s610 = ssub.s32 4, %s17
      %s611 = smul.u32 %s610, 2
      %s612 = scalar_lea.vmem %s222, %s611
      %v613 = vld [vmem:[%s612] sm:$0x3]
      %v614 = vpack.c.bf16 %v603, %v603
      %616 = vrot.lane.b32.xlu0 %v614, 32
      %v617 = vpop.permute.xlu0 %616
      %v619 = vsel %vm282, %v617, 0
      %621 = vmatprep.subr.bf16.mxu0 0
      %622 = vmatpush1.bf16.msra.mxu0 %v278
      %623 = vmatprep.subr.bf16.mxu0 0
      %624 = vmatpush1.bf16.msra.mxu0 %v279
      %625 = vmatprep.subr.bf16.mxu0 0
      %626 = vmatpush1.bf16.msra.mxu0 0
      %627 = vmatprep.subr.bf16.mxu0 0
      %628 = vmatpush1.bf16.msra.mxu0 0
      %629 = vmatprep.subr.bf16.mxu0 0
      %630 = vmatpush1.bf16.msra.mxu0 0
      %631 = vmatprep.subr.bf16.mxu0 0
      %632 = vmatpush1.bf16.msra.mxu0 0
      %633 = vmatprep.subr.bf16.mxu0 0
      %634 = vmatpush1.bf16.msra.mxu0 0
      %635 = vmatprep.subr.bf16.mxu0 0
      %636 = vmatpush1.bf16.msra.mxu0 0
      %637 = vmatprep.subr.bf16.mxu0 0
      %638 = vmatpush1.bf16.msra.mxu0 0
      %639 = vmatprep.subr.bf16.mxu0 0
      %640 = vmatpush1.bf16.msra.mxu0 0
      %641 = vmatprep.subr.bf16.mxu0 0
      %642 = vmatpush1.bf16.msra.mxu0 0
      %643 = vmatprep.subr.bf16.mxu0 0
      %644 = vmatpush1.bf16.msra.mxu0 0
      %645 = vmatprep.subr.bf16.mxu0 0
      %646 = vmatpush1.bf16.msra.mxu0 0
      %647 = vmatprep.subr.bf16.mxu0 0
      %648 = vmatpush1.bf16.msra.mxu0 0
      %649 = vmatprep.subr.bf16.mxu0 0
      %650 = vmatpush1.bf16.msra.mxu0 0
      %651 = vmatprep.subr.bf16.mxu0 0
      %652 = vmatpush1.bf16.msra.mxu0 0
      %653 = vmatprep.mubr.bf16.mxu0 0
      %654 = vmatmul.mubr.bf16.gmra.mrb[0].mxu0 %v619
      %v655 = vpop.f32.mrb[0].mxu0
      %v656 = vadd.f32 0.0, %v655
      %v657 = vpop.f32.mrb[0].mxu0
      %v658 = vpop.f32.mrb[0].mxu0
      %v659 = vpop.f32.mrb[0].mxu0
      %660 = vdwg.mxu0
      %v661 = vadd.f32 %v613, %v656
      %v662 = vxor.u32 %v661, 2147483648
      %v663 = vmul.f32 %v662, 1.442695
      %v664 = vpow.pop %v663
      %v665 = vadd.f32 %v664, 1.0
      %v666 = vrcp.pop %v665
      %v667 = vmul.f32 1.0, %v666
      %v668 = vtanh.pop %v661
      %v669 = vmul.f32 %v667, %v597
      %671 = vrot.lane.b32.xlu0 %v668, 64
      %v672 = vpop.permute.xlu0 %671
      %v674 = vmul.f32 %v667, %v672
      %676 = vrot.lane.b32.xlu0 %v674, 32
      %v677 = vpop.permute.xlu0 %676
      %v679 = vadd.f32 %v669, %v677
      %v680 = vtanh.pop %v679
      %682 = vrot.lane.b32.xlu0 %v680, 64
      %v683 = vpop.permute.xlu0 %682
      %v685 = vmul.f32 %v667, %v683
      %687 = vrot.lane.b32.xlu0 %v685, 32
      %v688 = vpop.permute.xlu0 %687
      %s690 = scalar_lea.vmem %s245, %s611
      %691 = vst.msk [vmem:[%s690] sm:$0x3] %vm360, %v688
      %s692 = smul.u32 %s17, 4294967293
      %s693 = sadd.s32 %s692, 5
      %s694 = smul.u32 %s693, 2
      %s695 = scalar_lea.vmem %s222, %s694
      %v696 = vld [vmem:[%s695] sm:$0x3]
      %v697 = vpack.c.bf16 %v685, %v685
      %699 = vrot.lane.b32.xlu0 %v697, 32
      %v700 = vpop.permute.xlu0 %699
      %v702 = vsel %vm282, %v700, 0
      %704 = vmatprep.subr.bf16.mxu0 0
      %705 = vmatpush1.bf16.msra.mxu0 %v278
      %706 = vmatprep.subr.bf16.mxu0 0
      %707 = vmatpush1.bf16.msra.mxu0 %v279
      %708 = vmatprep.subr.bf16.mxu0 0
      %709 = vmatpush1.bf16.msra.mxu0 0
      %710 = vmatprep.subr.bf16.mxu0 0
      %711 = vmatpush1.bf16.msra.mxu0 0
      %712 = vmatprep.subr.bf16.mxu0 0
      %713 = vmatpush1.bf16.msra.mxu0 0
      %714 = vmatprep.subr.bf16.mxu0 0
      %715 = vmatpush1.bf16.msra.mxu0 0
      %716 = vmatprep.subr.bf16.mxu0 0
      %717 = vmatpush1.bf16.msra.mxu0 0
      %718 = vmatprep.subr.bf16.mxu0 0
      %719 = vmatpush1.bf16.msra.mxu0 0
      %720 = vmatprep.subr.bf16.mxu0 0
      %721 = vmatpush1.bf16.msra.mxu0 0
      %722 = vmatprep.subr.bf16.mxu0 0
      %723 = vmatpush1.bf16.msra.mxu0 0
      %724 = vmatprep.subr.bf16.mxu0 0
      %725 = vmatpush1.bf16.msra.mxu0 0
      %726 = vmatprep.subr.bf16.mxu0 0
      %727 = vmatpush1.bf16.msra.mxu0 0
      %728 = vmatprep.subr.bf16.mxu0 0
      %729 = vmatpush1.bf16.msra.mxu0 0
      %730 = vmatprep.subr.bf16.mxu0 0
      %731 = vmatpush1.bf16.msra.mxu0 0
      %732 = vmatprep.subr.bf16.mxu0 0
      %733 = vmatpush1.bf16.msra.mxu0 0
      %734 = vmatprep.subr.bf16.mxu0 0
      %735 = vmatpush1.bf16.msra.mxu0 0
      %736 = vmatprep.mubr.bf16.mxu0 0
      %737 = vmatmul.mubr.bf16.gmra.mrb[0].mxu0 %v702
      %v738 = vpop.f32.mrb[0].mxu0
      %v739 = vadd.f32 0.0, %v738
      %v740 = vpop.f32.mrb[0].mxu0
      %v741 = vpop.f32.mrb[0].mxu0
      %v742 = vpop.f32.mrb[0].mxu0
      %743 = vdwg.mxu0
      %v744 = vadd.f32 %v696, %v739
      %v745 = vxor.u32 %v744, 2147483648
      %v746 = vmul.f32 %v745, 1.442695
      %v747 = vpow.pop %v746
      %v748 = vadd.f32 %v747, 1.0
      %v749 = vrcp.pop %v748
      %v750 = vmul.f32 1.0, %v749
      %v751 = vtanh.pop %v744
      %v752 = vmul.f32 %v750, %v679
      %754 = vrot.lane.b32.xlu0 %v751, 64
      %v755 = vpop.permute.xlu0 %754
      %v757 = vmul.f32 %v750, %v755
      %759 = vrot.lane.b32.xlu0 %v757, 32
      %v760 = vpop.permute.xlu0 %759
      %v762 = vadd.f32 %v752, %v760
      %v763 = vtanh.pop %v762
      %765 = vrot.lane.b32.xlu0 %v763, 64
      %v766 = vpop.permute.xlu0 %765
      %v768 = vmul.f32 %v750, %v766
      %770 = vrot.lane.b32.xlu0 %v768, 32
      %v771 = vpop.permute.xlu0 %770
      %s773 = scalar_lea.vmem %s245, %s694
      %774 = vst.msk [vmem:[%s773] sm:$0x3] %vm360, %v771
      %s775 = smul.u32 %s17, 4294967291
      %s776 = sadd.s32 %s775, 6
      %s777 = smul.u32 %s776, 2
      %s778 = scalar_lea.vmem %s222, %s777
      %v779 = vld [vmem:[%s778] sm:$0x3]
      %v780 = vpack.c.bf16 %v768, %v768
      %782 = vrot.lane.b32.xlu0 %v780, 32
      %v783 = vpop.permute.xlu0 %782
      %v785 = vsel %vm282, %v783, 0
      %787 = vmatprep.subr.bf16.mxu0 0
      %788 = vmatpush1.bf16.msra.mxu0 %v278
      %789 = vmatprep.subr.bf16.mxu0 0
      %790 = vmatpush1.bf16.msra.mxu0 %v279
      %791 = vmatprep.subr.bf16.mxu0 0
      %792 = vmatpush1.bf16.msra.mxu0 0
      %793 = vmatprep.subr.bf16.mxu0 0
      %794 = vmatpush1.bf16.msra.mxu0 0
      %795 = vmatprep.subr.bf16.mxu0 0
      %796 = vmatpush1.bf16.msra.mxu0 0
      %797 = vmatprep.subr.bf16.mxu0 0
      %798 = vmatpush1.bf16.msra.mxu0 0
      %799 = vmatprep.subr.bf16.mxu0 0
      %800 = vmatpush1.bf16.msra.mxu0 0
      %801 = vmatprep.subr.bf16.mxu0 0
      %802 = vmatpush1.bf16.msra.mxu0 0
      %803 = vmatprep.subr.bf16.mxu0 0
      %804 = vmatpush1.bf16.msra.mxu0 0
      %805 = vmatprep.subr.bf16.mxu0 0
      %806 = vmatpush1.bf16.msra.mxu0 0
      %807 = vmatprep.subr.bf16.mxu0 0
      %808 = vmatpush1.bf16.msra.mxu0 0
      %809 = vmatprep.subr.bf16.mxu0 0
      %810 = vmatpush1.bf16.msra.mxu0 0
      %811 = vmatprep.subr.bf16.mxu0 0
      %812 = vmatpush1.bf16.msra.mxu0 0
      %813 = vmatprep.subr.bf16.mxu0 0
      %814 = vmatpush1.bf16.msra.mxu0 0
      %815 = vmatprep.subr.bf16.mxu0 0
      %816 = vmatpush1.bf16.msra.mxu0 0
      %817 = vmatprep.subr.bf16.mxu0 0
      %818 = vmatpush1.bf16.msra.mxu0 0
      %819 = vmatprep.mubr.bf16.mxu0 0
      %820 = vmatmul.mubr.bf16.gmra.mrb[0].mxu0 %v785
      %v821 = vpop.f32.mrb[0].mxu0
      %v822 = vadd.f32 0.0, %v821
      %v823 = vpop.f32.mrb[0].mxu0
      %v824 = vpop.f32.mrb[0].mxu0
      %v825 = vpop.f32.mrb[0].mxu0
      %826 = vdwg.mxu0
      %v827 = vadd.f32 %v779, %v822
      %v828 = vxor.u32 %v827, 2147483648
      %v829 = vmul.f32 %v828, 1.442695
      %v830 = vpow.pop %v829
      %v831 = vadd.f32 %v830, 1.0
      %v832 = vrcp.pop %v831
      %v833 = vmul.f32 1.0, %v832
      %v834 = vtanh.pop %v827
      %v835 = vmul.f32 %v833, %v762
      %837 = vrot.lane.b32.xlu0 %v834, 64
      %v838 = vpop.permute.xlu0 %837
      %v840 = vmul.f32 %v833, %v838
      %842 = vrot.lane.b32.xlu0 %v840, 32
      %v843 = vpop.permute.xlu0 %842
      %v845 = vadd.f32 %v835, %v843
      %v846 = vtanh.pop %v845
      %848 = vrot.lane.b32.xlu0 %v846, 64
      %v849 = vpop.permute.xlu0 %848
      %v851 = vmul.f32 %v833, %v849
      %853 = vrot.lane.b32.xlu0 %v851, 32
      %v854 = vpop.permute.xlu0 %853
      %s856 = scalar_lea.vmem %s245, %s777
      %857 = vst.msk [vmem:[%s856] sm:$0x3] %vm360, %v854
      %s858 = smul.u32 %s17, 4294967289
      %s859 = sadd.s32 %s858, 7
      %s860 = smul.u32 %s859, 2
      %s861 = scalar_lea.vmem %s222, %s860
      %v862 = vld [vmem:[%s861] sm:$0x3]
      %v863 = vpack.c.bf16 %v851, %v851
      %865 = vrot.lane.b32.xlu0 %v863, 32
      %v866 = vpop.permute.xlu0 %865
      %v868 = vsel %vm282, %v866, 0
      %870 = vmatprep.subr.bf16.mxu0 0
      %871 = vmatpush1.bf16.msra.mxu0 %v278
      %872 = vmatprep.subr.bf16.mxu0 0
      %873 = vmatpush1.bf16.msra.mxu0 %v279
      %874 = vmatprep.subr.bf16.mxu0 0
      %875 = vmatpush1.bf16.msra.mxu0 0
      %876 = vmatprep.subr.bf16.mxu0 0
      %877 = vmatpush1.bf16.msra.mxu0 0
      %878 = vmatprep.subr.bf16.mxu0 0
      %879 = vmatpush1.bf16.msra.mxu0 0
      %880 = vmatprep.subr.bf16.mxu0 0
      %881 = vmatpush1.bf16.msra.mxu0 0
      %882 = vmatprep.subr.bf16.mxu0 0
      %883 = vmatpush1.bf16.msra.mxu0 0
      %884 = vmatprep.subr.bf16.mxu0 0
      %885 = vmatpush1.bf16.msra.mxu0 0
      %886 = vmatprep.subr.bf16.mxu0 0
      %887 = vmatpush1.bf16.msra.mxu0 0
      %888 = vmatprep.subr.bf16.mxu0 0
      %889 = vmatpush1.bf16.msra.mxu0 0
      %890 = vmatprep.subr.bf16.mxu0 0
      %891 = vmatpush1.bf16.msra.mxu0 0
      %892 = vmatprep.subr.bf16.mxu0 0
      %893 = vmatpush1.bf16.msra.mxu0 0
      %894 = vmatprep.subr.bf16.mxu0 0
      %895 = vmatpush1.bf16.msra.mxu0 0
      %896 = vmatprep.subr.bf16.mxu0 0
      %897 = vmatpush1.bf16.msra.mxu0 0
      %898 = vmatprep.subr.bf16.mxu0 0
      %899 = vmatpush1.bf16.msra.mxu0 0
      %900 = vmatprep.subr.bf16.mxu0 0
      %901 = vmatpush1.bf16.msra.mxu0 0
      %902 = vmatprep.mubr.bf16.mxu0 0
      %903 = vmatmul.mubr.bf16.gmra.mrb[0].mxu0 %v868
      %v904 = vpop.f32.mrb[0].mxu0
      %v905 = vadd.f32 0.0, %v904
      %v906 = vpop.f32.mrb[0].mxu0
      %v907 = vpop.f32.mrb[0].mxu0
      %v908 = vpop.f32.mrb[0].mxu0
      %909 = vdwg.mxu0
      %v910 = vadd.f32 %v862, %v905
      %v911 = vxor.u32 %v910, 2147483648
      %v912 = vmul.f32 %v911, 1.442695
      %v913 = vpow.pop %v912
      %v914 = vadd.f32 %v913, 1.0
      %v915 = vrcp.pop %v914
      %v916 = vmul.f32 1.0, %v915
      %v917 = vtanh.pop %v910
      %v918 = vmul.f32 %v916, %v845
      %920 = vrot.lane.b32.xlu0 %v917, 64
      %v921 = vpop.permute.xlu0 %920
      %v923 = vmul.f32 %v916, %v921
      %925 = vrot.lane.b32.xlu0 %v923, 32
      %v926 = vpop.permute.xlu0 %925
      %v928 = vadd.f32 %v918, %v926
      %v929 = vtanh.pop %v928
      %931 = vrot.lane.b32.xlu0 %v929, 64
      %v932 = vpop.permute.xlu0 %931
      %v934 = vmul.f32 %v916, %v932
      %936 = vrot.lane.b32.xlu0 %v934, 32
      %v937 = vpop.permute.xlu0 %936
      %s939 = scalar_lea.vmem %s245, %s860
      %940 = vst.msk [vmem:[%s939] sm:$0x3] %vm360, %v937
      %941 = vst.msk [vmem:[#allocation2] sm:$0x3] %vm360, %v937
      %943 = vrot.lane.b32.xlu0 %v928, 96
      %v944 = vpop.permute.xlu0 %943
      %946 = vst.msk [vmem:[#allocation3] sm:$0x3] %vm360, %v944
      %s947 = smul.u32 %s18, 2
      %s948 = ssub.s32 0, %s947
      %s949 = smul.u32 %s17, %s948
      %s950 = sadd.s32 %s18, %s949
      %s951 = smul.u32 8, %s950
      %p952 = scmp.lt.s32.totalorder %s17, 1
      %s953 = scalar_select %p952, %s17, 1
      %p954 = scmp.lt.s32.totalorder %s951, 7
      %s955 = scalar_select %p954, %s951, 7
      %s956 = smul.addr %s953, 8
      %s957 = sadd.s32 %s955, %s956
      %s958 = smul.addr %s957, 2
      %s959 = scalar_lea.vmem %s2, %s958
      // Predicated region
      $region33: #{recurrent_encoder_forward.3} parent=27 // pred_check
        %p960 = pneg %p115
      $region34: #{recurrent_encoder_forward.3} parent=27 // pred_check_branch
        %962 = sbr.rel (%p960) target = $region36
      $region35: #{recurrent_encoder_forward.3} parent=27 // pred_region
        %s963 = smul.u32 %s18, 2
        %s964 = ssub.s32 0, %s963
        %s965 = smul.u32 %s17, %s964
        %s966 = sadd.s32 %s18, %s965
        %s967 = smul.u32 8, %s966
      $region36: #{recurrent_encoder_forward.3} parent=27 // pred_fallthru
        _
    $region28: #{recurrent_encoder_forward.3} parent=5 // pred_fallthru
      _
    %p968 = scmp.le.s32.totalorder 2, %s8
    // Predicated region
    $region37: #{recurrent_encoder_forward.3} parent=5 // pred_check
      %p969 = pneg %p968
    $region38: #{recurrent_encoder_forward.3} parent=5 // pred_check_branch
      %971 = sbr.rel (%p969) target = $region40
    $region39: #{recurrent_encoder_forward.3} parent=5 // pred_region
      %s972 = ssub.s32 %s8, 2
      // Predicated region
      $region41: #{recurrent_encoder_forward.3} parent=39 // pred_check
        %p973 = pneg %p121
      $region42: #{recurrent_encoder_forward.3} parent=39 // pred_check_branch
        %975 = sbr.rel (%p973) target = $region44
      $region43: #{recurrent_encoder_forward.3} parent=39 // pred_region
        %s976 = smul.u32 %s20, 2
        %s977 = ssub.s32 0, %s976
        %s978 = smul.u32 %s19, %s977
        %s979 = sadd.s32 %s20, %s978
        %s980 = smul.u32 8, %s979
        %p981 = scmp.lt.s32.totalorder %s19, 1
        %s982 = scalar_select %p981, %s19, 1
        %p983 = scmp.lt.s32.totalorder %s980, 7
        %s984 = scalar_select %p983, %s980, 7
        %s985 = smul.addr %s982, 8
        %s986 = sadd.s32 %s984, %s985
        %s987 = smul.addr %s986, 2
        %s988 = scalar_lea.vmem %s2, %s987
      $region44: #{recurrent_encoder_forward.3} parent=39 // pred_fallthru
        _
    $region40: #{recurrent_encoder_forward.3} parent=5 // pred_fallthru
      _
  $region6: #{recurrent_encoder_forward.3} parent=0 // loop_footer
    %s12 = sadd.s32 1, %s8
  $region7: #{recurrent_encoder_forward.3} parent=0 // loop_footer_branch
    %7 = sbr.rel target = $region3
  $region8: #{recurrent_encoder_forward.3} parent=0 // loop_exit
    _

</llo_original>
